<compile_context>
chip_gen: v7x
topology: tpu7x:2x2x1
jax: 0.10.0
libtpu: 0.0.40
codegen_flags: <defaults>
</compile_context>

<pallas_src>
import functools

import jax
import jax.numpy as jnp
from jax.experimental import pallas as pl
from jax.experimental.pallas import tpu as pltpu


LANE = 128
_VMEM_TARGET = 48 * 1024 * 1024  # conservative: fits under v7x's 64 MiB physical


def _round_up(n, m):
    return ((n + m - 1) // m) * m


def _pad2d(a, rows, cols, dtype):
    out = jnp.zeros((rows, cols), dtype)
    return out.at[: a.shape[0], : a.shape[1]].set(a.astype(dtype))


def _plan(n_pad, f_mid, f_out):
    """Pick (tm, tk, xw_resident, vmem_limit_bytes) for the aggregation kernel."""
    resident_xw = 2 * n_pad * f_mid * 2  # bf16, worst-case double buffer
    xw_resident = resident_xw <= _VMEM_TARGET // 2
    for tm in (512, 256, 128):
        if n_pad % tm:
            continue
        for tk in (2048, 1024, 512, 256, 128):
            if n_pad % tk:
                continue
            a_buf = 2 * tm * tk * 2                  # bf16 A tile, double-buffered
            out_buf = 2 * tm * f_out * 4
            acc_buf = tm * f_mid * 4
            xw_buf = resident_xw if xw_resident else 2 * tk * f_mid * 2
            w_next_buf = 2 * f_mid * f_out * 2
            total = a_buf + out_buf + acc_buf + xw_buf + w_next_buf + (2 << 20)
            if total <= _VMEM_TARGET:
                vmem = min(max(total, 32 * 1024 * 1024), 64 * 1024 * 1024)
                return tm, tk, xw_resident, vmem
    return 128, 128, False, 32 * 1024 * 1024


# ----------------------------------------------------------------------------
# Kernel 1: feature transform  XW = X @ W   (row-tiled, small)
# ----------------------------------------------------------------------------
def _xw_kernel(x_ref, w_ref, o_ref):
    o_ref[...] = jnp.dot(
        x_ref[...], w_ref[...], preferred_element_type=jnp.float32
    ).astype(o_ref.dtype)


def feature_transform(x_pad, w_pad, *, tm, vmem_limit):
    n_pad, f_in = x_pad.shape
    f_out = w_pad.shape[1]
    return pl.pallas_call(
        _xw_kernel,
        out_shape=jax.ShapeDtypeStruct((n_pad, f_out), jnp.bfloat16),
        grid_spec=pltpu.PrefetchScalarGridSpec(
            num_scalar_prefetch=0,
            grid=(n_pad // tm,),
            in_specs=[
                pl.BlockSpec((tm, f_in), lambda i: (i, 0)),       # X rows
                pl.BlockSpec((f_in, f_out), lambda i: (0, 0)),    # W (resident)
            ],
            out_specs=pl.BlockSpec((tm, f_out), lambda i: (i, 0)),
        ),
        compiler_params=pltpu.CompilerParams(
            dimension_semantics=("parallel",),
            vmem_limit_bytes=vmem_limit,
        ),
    )(x_pad, w_pad)


# ----------------------------------------------------------------------------
# Kernel 2: aggregation  out = A_hat @ XW + b  (+ optional ReLU, optional
#           fused next-layer feature transform in the epilogue)
# Tiled K-reduction with f32 VMEM accumulator; XW resident in VMEM.
# ----------------------------------------------------------------------------
def _aggregate_kernel(*refs, tk, apply_relu, fuse_next, xw_resident):
    if fuse_next:
        a_ref, xw_ref, b_ref, w_next_ref, o_ref, acc_ref = refs
    else:
        a_ref, xw_ref, b_ref, o_ref, acc_ref = refs
        w_next_ref = None

    k = pl.program_id(1)
    if xw_resident:
        start = pl.multiple_of(k * tk, tk)
        xw_slab = xw_ref[pl.ds(start, tk), :]       # slice the resident buffer
    else:
        xw_slab = xw_ref[...]                       # streamed K-slab fallback

    contrib = jnp.dot(a_ref[...], xw_slab, preferred_element_type=jnp.float32)

    @pl.when(k == 0)
    def _():
        acc_ref[...] = contrib                      # no zero-store + "+="

    @pl.when(k != 0)
    def _():
        acc_ref[...] += contrib

    @pl.when(k == pl.num_programs(1) - 1)
    def _():
        out = acc_ref[...] + b_ref[...]             # bias only in epilogue
        if apply_relu:
            out = jnp.maximum(out, 0.0)
        if fuse_next:
            # fused next-layer feature transform: rides in MXU slack
            out = jnp.dot(
                out.astype(w_next_ref.dtype), w_next_ref[...],
                preferred_element_type=jnp.float32,
            )
        o_ref[...] = out.astype(o_ref.dtype)


def aggregate(a_pad, xw_pad, b_pad, w_next_pad, *, tm, tk, xw_resident,
              apply_relu, out_dtype, vmem_limit):
    n_pad = a_pad.shape[0]
    f_mid = xw_pad.shape[1]
    fuse_next = w_next_pad is not None
    f_out = w_next_pad.shape[1] if fuse_next else f_mid

    if xw_resident:
        # constant index map => single DMA, buffer reused for every (i, k)
        xw_spec = pl.BlockSpec((n_pad, f_mid), lambda i, k: (0, 0))
    else:
        xw_spec = pl.BlockSpec((tk, f_mid), lambda i, k: (k, 0))

    in_specs = [
        pl.BlockSpec((tm, tk), lambda i, k: (i, k)),        # A_hat tile
        xw_spec,                                            # XW (resident)
        pl.BlockSpec((1, f_mid), lambda i, k: (0, 0)),      # bias
    ]
    operands = [a_pad, xw_pad, b_pad]
    if fuse_next:
        in_specs.append(pl.BlockSpec((f_mid, f_out), lambda i, k: (0, 0)))
        operands.append(w_next_pad)

    kernel = functools.partial(
        _aggregate_kernel, tk=tk, apply_relu=apply_relu,
        fuse_next=fuse_next, xw_resident=xw_resident,
    )
    return pl.pallas_call(
        kernel,
        out_shape=jax.ShapeDtypeStruct((n_pad, f_out), out_dtype),
        grid_spec=pltpu.PrefetchScalarGridSpec(
            num_scalar_prefetch=0,
            grid=(n_pad // tm, n_pad // tk),
            in_specs=in_specs,
            out_specs=pl.BlockSpec((tm, f_out), lambda i, k: (i, 0)),
            scratch_shapes=[pltpu.VMEM((tm, f_mid), jnp.float32)],
        ),
        compiler_params=pltpu.CompilerParams(
            # TODO(synk): try pltpu.CORE_PARALLEL on axis 0 for explicit v7x
            # 2-TensorCore sharding (verify in trace).
            dimension_semantics=("parallel", "arbitrary"),
            vmem_limit_bytes=vmem_limit,
        ),
    )(*operands)


# ----------------------------------------------------------------------------
# Graph prep (once per static graph): padded bf16 sym-normalized (A + I).
# Matches torch_geometric gcn_norm (add_self_loops=True, improved=False,
# flow='source_to_target').
# ----------------------------------------------------------------------------
def prepare_graph(edge_index, num_nodes):
    n_pad = _round_up(max(num_nodes, 8), LANE)
    src = edge_index[0]
    dst = edge_index[1]
    loop = jnp.arange(num_nodes, dtype=edge_index.dtype)
    src = jnp.concatenate([src, loop])
    dst = jnp.concatenate([dst, loop])
    ew = jnp.ones(src.shape[0], dtype=jnp.float32)
    deg = jnp.zeros((num_nodes,), jnp.float32).at[dst].add(ew)
    deg_inv_sqrt = jnp.where(deg > 0, jax.lax.rsqrt(deg), 0.0)
    norm = deg_inv_sqrt[src] * ew * deg_inv_sqrt[dst]
    # A_hat[target, source] = norm  => out = A_hat @ X ; scatter straight into
    # the padded buffer (no second pad pass).
    a_pad = jnp.zeros((n_pad, n_pad), jnp.float32).at[dst, src].add(norm)
    return a_pad.astype(jnp.bfloat16)


# ----------------------------------------------------------------------------
# Encoder forward: relu(GCN1(x)) -> GCN2
# ----------------------------------------------------------------------------
def encoder_forward(x, a_pad, params):
    n, f_in = x.shape
    n_pad = a_pad.shape[0]
    hidden = params["w1"].shape[1]
    out_ch = params["w2"].shape[1]

    f_in_pad = _round_up(f_in, LANE)
    hid_pad = _round_up(hidden, LANE)
    out_pad = _round_up(out_ch, LANE)

    x_pad = _pad2d(x, n_pad, f_in_pad, jnp.bfloat16)
    w1_pad = _pad2d(params["w1"], f_in_pad, hid_pad, jnp.bfloat16)
    b1_pad = _pad2d(params["b1"].reshape(1, -1), 1, hid_pad, jnp.float32)
    w2_pad = _pad2d(params["w2"], hid_pad, out_pad, jnp.bfloat16)
    b2_pad = _pad2d(params["b2"].reshape(1, -1), 1, out_pad, jnp.float32)

    # Layer 1 feature transform: XW1 = X @ W1
    tm1, tk1, res1, vm1 = _plan(n_pad, hid_pad, out_pad)
    xw1 = feature_transform(x_pad, w1_pad, tm=tm1, vmem_limit=vm1)

    # Fused: XW2 = relu(A_hat @ XW1 + b1) @ W2   (layer-2 transform in epilogue)
    xw2 = aggregate(
        a_pad, xw1, b1_pad, w2_pad,
        tm=tm1, tk=tk1, xw_resident=res1,
        apply_relu=True, out_dtype=jnp.bfloat16, vmem_limit=vm1,
    )

    # Layer 2 aggregation: Z = A_hat @ XW2 + b2
    tm2, tk2, res2, vm2 = _plan(n_pad, out_pad, out_pad)
    z = aggregate(
        a_pad, xw2, b2_pad, None,
        tm=tm2, tk=tk2, xw_resident=res2,
        apply_relu=False, out_dtype=jnp.float32, vmem_limit=vm2,
    )
    return z[:n, :out_ch]


def init_params(key, in_channels, out_channels):
    hidden = 2 * out_channels
    k1, k2 = jax.random.split(key)
    w1 = jax.random.normal(k1, (in_channels, hidden), jnp.float32) * (
        1.0 / jnp.sqrt(in_channels)
    )
    w2 = jax.random.normal(k2, (hidden, out_channels), jnp.float32) * (
        1.0 / jnp.sqrt(hidden)
    )
    b1 = jnp.zeros((hidden,), jnp.float32)
    b2 = jnp.zeros((out_channels,), jnp.float32)
    return {"w1": w1, "b1": b1, "w2": w2, "b2": b2}


if __name__ == "__main__":
    key = jax.random.PRNGKey(0)
    k_x, k_e, k_p = jax.random.split(key, 3)

    num_nodes = 64
    num_edges = 128
    in_channels = 16
    out_channels = 8

    x = jax.random.normal(k_x, (num_nodes, in_channels), jnp.float32)
    edge_index = jax.random.randint(
        k_e, (2, num_edges), minval=0, maxval=num_nodes, dtype=jnp.int32
    )
    params = init_params(k_p, in_channels, out_channels)

    # Built once per static graph, outside the per-forward hot path.
    a_pad = prepare_graph(edge_index, num_nodes)

    fwd = jax.jit(encoder_forward)
    z = jax.block_until_ready(fwd(x, a_pad, params))

    assert z.shape == (num_nodes, out_channels), z.shape
    assert bool(jnp.all(jnp.isfinite(z)))
    print("KERNEL_OK")
</pallas_src>

<mosaic_0001>
module attributes {stable_mosaic.version = 11 : i64} {
  func.func @_xw_kernel(%arg0: i32, %arg1: memref<128x128xbf16, #tpu.memory_space<vmem>>, %arg2: memref<128x128xbf16, #tpu.memory_space<vmem>>, %arg3: memref<128x128xbf16, #tpu.memory_space<vmem>>) attributes {dimension_semantics = [#tpu.dimension_semantics<parallel>], iteration_bounds = array<i64: 1>, scalar_prefetch = 0 : i64, scratch_operands = 0 : i64, tpu.core_type = #tpu.core_type<tc>, window_params = [{transform_indices = @transform_0, window_bounds = array<i64: 128, 128>}, {pipeline_mode = #tpu.pipeline_mode<synchronous>, transform_indices = @transform_1, window_bounds = array<i64: 128, 128>}, {transform_indices = @transform_2, window_bounds = array<i64: 128, 128>}]} {
    %c0 = arith.constant 0 : index
    %c0_0 = arith.constant 0 : index
    %0 = vector.load %arg1[%c0, %c0_0] : memref<128x128xbf16, #tpu.memory_space<vmem>>, vector<128x128xbf16>
    %c0_1 = arith.constant 0 : index
    %c0_2 = arith.constant 0 : index
    %1 = vector.load %arg2[%c0_1, %c0_2] : memref<128x128xbf16, #tpu.memory_space<vmem>>, vector<128x128xbf16>
    %cst = arith.constant dense<0.000000e+00> : vector<128x128xf32>
    %2 = tpu.matmul %0, %1, %cst {dimension_numbers = #tpu.dot_dimension_numbers<[1], [0], [0], [1], [0, 0, 1, 1], [], []>} : vector<128x128xbf16>, vector<128x128xbf16>, vector<128x128xf32> -> vector<128x128xf32>
    %3 = arith.truncf %2 : vector<128x128xf32> to vector<128x128xbf16>
    %c0_3 = arith.constant 0 : index
    %c0_4 = arith.constant 0 : index
    %4 = vector.load %arg3[%c0_3, %c0_4] : memref<128x128xbf16, #tpu.memory_space<vmem>>, vector<128x128xbf16>
    tpu.vector_store %arg3[%c0_3, %c0_4], %3 {strides = array<i32>} : memref<128x128xbf16, #tpu.memory_space<vmem>>, vector<128x128xbf16>,
    return
  }
  func.func @transform_0(%arg0: i32) -> (i32, i32) {
    %c0_i32 = arith.constant 0 : i32
    %c0_i32_0 = arith.constant 0 : i32
    return %arg0, %c0_i32 : i32, i32
  }
  func.func @transform_1(%arg0: i32) -> (i32, i32) {
    %c0_i32 = arith.constant 0 : i32
    %c0_i32_0 = arith.constant 0 : i32
    %c0_i32_1 = arith.constant 0 : i32
    return %c0_i32, %c0_i32_0 : i32, i32
  }
  func.func @transform_2(%arg0: i32) -> (i32, i32) {
    %c0_i32 = arith.constant 0 : i32
    %c0_i32_0 = arith.constant 0 : i32
    return %arg0, %c0_i32 : i32, i32
  }
}

module attributes {stable_mosaic.version = 11 : i64} {
  func.func @_aggregate_kernel(%arg0: i32, %arg1: i32, %arg2: memref<128x128xbf16, #tpu.memory_space<vmem>>, %arg3: memref<128x128xbf16, #tpu.memory_space<vmem>>, %arg4: memref<1x128xf32, #tpu.memory_space<vmem>>, %arg5: memref<128x128xbf16, #tpu.memory_space<vmem>>, %arg6: memref<128x128xbf16, #tpu.memory_space<vmem>>, %arg7: memref<128x128xf32, #tpu.memory_space<vmem>>) attributes {dimension_semantics = [#tpu.dimension_semantics<parallel>, #tpu.dimension_semantics<arbitrary>], iteration_bounds = array<i64: 1, 1>, scalar_prefetch = 0 : i64, scratch_operands = 1 : i64, tpu.core_type = #tpu.core_type<tc>, window_params = [{transform_indices = @transform_0, window_bounds = array<i64: 128, 128>}, {pipeline_mode = #tpu.pipeline_mode<synchronous>, transform_indices = @transform_1, window_bounds = array<i64: 128, 128>}, {pipeline_mode = #tpu.pipeline_mode<synchronous>, transform_indices = @transform_2, window_bounds = array<i64: 1, 128>}, {pipeline_mode = #tpu.pipeline_mode<synchronous>, transform_indices = @transform_3, window_bounds = array<i64: 128, 128>}, {transform_indices = @transform_4, window_bounds = array<i64: 128, 128>}]} {
    %c128_i32 = arith.constant 128 : i32
    %0 = arith.muli %arg1, %c128_i32 : i32
    %1 = tpu.assume_multiple %0, 128 : i32
    %2 = arith.index_cast %1 : i32 to index
    %c0 = arith.constant 0 : index
    %3 = vector.load %arg3[%2, %c0] : memref<128x128xbf16, #tpu.memory_space<vmem>>, vector<128x128xbf16>
    %c0_0 = arith.constant 0 : index
    %c0_1 = arith.constant 0 : index
    %4 = vector.load %arg2[%c0_0, %c0_1] : memref<128x128xbf16, #tpu.memory_space<vmem>>, vector<128x128xbf16>
    %cst = arith.constant dense<0.000000e+00> : vector<128x128xf32>
    %5 = tpu.matmul %4, %3, %cst {dimension_numbers = #tpu.dot_dimension_numbers<[1], [0], [0], [1], [0, 0, 1, 1], [], []>} : vector<128x128xbf16>, vector<128x128xbf16>, vector<128x128xf32> -> vector<128x128xf32>
    %c0_i32 = arith.constant 0 : i32
    %6 = arith.cmpi eq, %arg1, %c0_i32 : i32
    %7 = arith.extui %6 : i1 to i32
    %c0_i32_2 = arith.constant 0 : i32
    %8 = arith.cmpi ne, %7, %c0_i32_2 : i32
    scf.if %8 {
      %c0_7 = arith.constant 0 : index
      %c0_8 = arith.constant 0 : index
      %15 = vector.load %arg7[%c0_7, %c0_8] : memref<128x128xf32, #tpu.memory_space<vmem>>, vector<128x128xf32>
      tpu.vector_store %arg7[%c0_7, %c0_8], %5 {strides = array<i32>} : memref<128x128xf32, #tpu.memory_space<vmem>>, vector<128x128xf32>,
    } else {
    }
    %c0_i32_3 = arith.constant 0 : i32
    %9 = arith.cmpi ne, %arg1, %c0_i32_3 : i32
    %10 = arith.extui %9 : i1 to i32
    %c0_i32_4 = arith.constant 0 : i32
    %11 = arith.cmpi ne, %10, %c0_i32_4 : i32
    scf.if %11 {
      %c0_7 = arith.constant 0 : index
      %c0_8 = arith.constant 0 : index
      %15 = vector.load %arg7[%c0_7, %c0_8] : memref<128x128xf32, #tpu.memory_space<vmem>>, vector<128x128xf32>
      %16 = arith.addf %15, %5 : vector<128x128xf32>
      %c0_9 = arith.constant 0 : index
      %c0_10 = arith.constant 0 : index
      %17 = vector.load %arg7[%c0_9, %c0_10] : memref<128x128xf32, #tpu.memory_space<vmem>>, vector<128x128xf32>
      tpu.vector_store %arg7[%c0_9, %c0_10], %16 {strides = array<i32>} : memref<128x128xf32, #tpu.memory_space<vmem>>, vector<128x128xf32>,
    } else {
    }
    %c0_i32_5 = arith.constant 0 : i32
    %12 = arith.cmpi eq, %arg1, %c0_i32_5 : i32
    %13 = arith.extui %12 : i1 to i32
    %c0_i32_6 = arith.constant 0 : i32
    %14 = arith.cmpi ne, %13, %c0_i32_6 : i32
    scf.if %14 {
      %c0_7 = arith.constant 0 : index
      %c0_8 = arith.constant 0 : index
      %15 = vector.load %arg7[%c0_7, %c0_8] : memref<128x128xf32, #tpu.memory_space<vmem>>, vector<128x128xf32>
      %c0_9 = arith.constant 0 : index
      %c0_10 = arith.constant 0 : index
      %16 = vector.load %arg4[%c0_9, %c0_10] : memref<1x128xf32, #tpu.memory_space<vmem>>, vector<1x128xf32>
      %17 = vector.broadcast %16 : vector<1x128xf32> to vector<128x128xf32>
      %18 = arith.addf %15, %17 : vector<128x128xf32>
      %cst_11 = arith.constant 0.000000e+00 : f32
      %19 = vector.broadcast %cst_11 : f32 to vector<128x128xf32>
      %20 = arith.maximumf %18, %19 : vector<128x128xf32>
      %21 = arith.truncf %20 : vector<128x128xf32> to vector<128x128xbf16>
      %c0_12 = arith.constant 0 : index
      %c0_13 = arith.constant 0 : index
      %22 = vector.load %arg5[%c0_12, %c0_13] : memref<128x128xbf16, #tpu.memory_space<vmem>>, vector<128x128xbf16>
      %cst_14 = arith.constant dense<0.000000e+00> : vector<128x128xf32>
      %23 = tpu.matmul %21, %22, %cst_14 {dimension_numbers = #tpu.dot_dimension_numbers<[1], [0], [0], [1], [0, 0, 1, 1], [], []>} : vector<128x128xbf16>, vector<128x128xbf16>, vector<128x128xf32> -> vector<128x128xf32>
      %24 = arith.truncf %23 : vector<128x128xf32> to vector<128x128xbf16>
      %c0_15 = arith.constant 0 : index
      %c0_16 = arith.constant 0 : index
      %25 = vector.load %arg6[%c0_15, %c0_16] : memref<128x128xbf16, #tpu.memory_space<vmem>>, vector<128x128xbf16>
      tpu.vector_store %arg6[%c0_15, %c0_16], %24 {strides = array<i32>} : memref<128x128xbf16, #tpu.memory_space<vmem>>, vector<128x128xbf16>,
    } else {
    }
    return
  }
  func.func @transform_0(%arg0: i32, %arg1: i32) -> (i32, i32) {
    %c0_i32 = arith.constant 0 : i32
    return %arg0, %arg1 : i32, i32
  }
  func.func @transform_1(%arg0: i32, %arg1: i32) -> (i32, i32) {
    %c0_i32 = arith.constant 0 : i32
    %c0_i32_0 = arith.constant 0 : i32
    %c0_i32_1 = arith.constant 0 : i32
    return %c0_i32, %c0_i32_0 : i32, i32
  }
  func.func @transform_2(%arg0: i32, %arg1: i32) -> (i32, i32) {
    %c0_i32 = arith.constant 0 : i32
    %c0_i32_0 = arith.constant 0 : i32
    %c0_i32_1 = arith.constant 0 : i32
    return %c0_i32, %c0_i32_0 : i32, i32
  }
  func.func @transform_3(%arg0: i32, %arg1: i32) -> (i32, i32) {
    %c0_i32 = arith.constant 0 : i32
    %c0_i32_0 = arith.constant 0 : i32
    %c0_i32_1 = arith.constant 0 : i32
    return %c0_i32, %c0_i32_0 : i32, i32
  }
  func.func @transform_4(%arg0: i32, %arg1: i32) -> (i32, i32) {
    %c0_i32 = arith.constant 0 : i32
    %c0_i32_0 = arith.constant 0 : i32
    return %arg0, %c0_i32 : i32, i32
  }
}

module attributes {stable_mosaic.version = 11 : i64} {
  func.func @_aggregate_kernel(%arg0: i32, %arg1: i32, %arg2: memref<128x128xbf16, #tpu.memory_space<vmem>>, %arg3: memref<128x128xbf16, #tpu.memory_space<vmem>>, %arg4: memref<1x128xf32, #tpu.memory_space<vmem>>, %arg5: memref<128x128xf32, #tpu.memory_space<vmem>>, %arg6: memref<128x128xf32, #tpu.memory_space<vmem>>) attributes {dimension_semantics = [#tpu.dimension_semantics<parallel>, #tpu.dimension_semantics<arbitrary>], iteration_bounds = array<i64: 1, 1>, scalar_prefetch = 0 : i64, scratch_operands = 1 : i64, tpu.core_type = #tpu.core_type<tc>, window_params = [{transform_indices = @transform_0, window_bounds = array<i64: 128, 128>}, {pipeline_mode = #tpu.pipeline_mode<synchronous>, transform_indices = @transform_1, window_bounds = array<i64: 128, 128>}, {pipeline_mode = #tpu.pipeline_mode<synchronous>, transform_indices = @transform_2, window_bounds = array<i64: 1, 128>}, {transform_indices = @transform_3, window_bounds = array<i64: 128, 128>}]} {
    %c128_i32 = arith.constant 128 : i32
    %0 = arith.muli %arg1, %c128_i32 : i32
    %1 = tpu.assume_multiple %0, 128 : i32
    %2 = arith.index_cast %1 : i32 to index
    %c0 = arith.constant 0 : index
    %3 = vector.load %arg3[%2, %c0] : memref<128x128xbf16, #tpu.memory_space<vmem>>, vector<128x128xbf16>
    %c0_0 = arith.constant 0 : index
    %c0_1 = arith.constant 0 : index
    %4 = vector.load %arg2[%c0_0, %c0_1] : memref<128x128xbf16, #tpu.memory_space<vmem>>, vector<128x128xbf16>
    %cst = arith.constant dense<0.000000e+00> : vector<128x128xf32>
    %5 = tpu.matmul %4, %3, %cst {dimension_numbers = #tpu.dot_dimension_numbers<[1], [0], [0], [1], [0, 0, 1, 1], [], []>} : vector<128x128xbf16>, vector<128x128xbf16>, vector<128x128xf32> -> vector<128x128xf32>
    %c0_i32 = arith.constant 0 : i32
    %6 = arith.cmpi eq, %arg1, %c0_i32 : i32
    %7 = arith.extui %6 : i1 to i32
    %c0_i32_2 = arith.constant 0 : i32
    %8 = arith.cmpi ne, %7, %c0_i32_2 : i32
    scf.if %8 {
      %c0_7 = arith.constant 0 : index
      %c0_8 = arith.constant 0 : index
      %15 = vector.load %arg6[%c0_7, %c0_8] : memref<128x128xf32, #tpu.memory_space<vmem>>, vector<128x128xf32>
      tpu.vector_store %arg6[%c0_7, %c0_8], %5 {strides = array<i32>} : memref<128x128xf32, #tpu.memory_space<vmem>>, vector<128x128xf32>,
    } else {
    }
    %c0_i32_3 = arith.constant 0 : i32
    %9 = arith.cmpi ne, %arg1, %c0_i32_3 : i32
    %10 = arith.extui %9 : i1 to i32
    %c0_i32_4 = arith.constant 0 : i32
    %11 = arith.cmpi ne, %10, %c0_i32_4 : i32
    scf.if %11 {
      %c0_7 = arith.constant 0 : index
      %c0_8 = arith.constant 0 : index
      %15 = vector.load %arg6[%c0_7, %c0_8] : memref<128x128xf32, #tpu.memory_space<vmem>>, vector<128x128xf32>
      %16 = arith.addf %15, %5 : vector<128x128xf32>
      %c0_9 = arith.constant 0 : index
      %c0_10 = arith.constant 0 : index
      %17 = vector.load %arg6[%c0_9, %c0_10] : memref<128x128xf32, #tpu.memory_space<vmem>>, vector<128x128xf32>
      tpu.vector_store %arg6[%c0_9, %c0_10], %16 {strides = array<i32>} : memref<128x128xf32, #tpu.memory_space<vmem>>, vector<128x128xf32>,
    } else {
    }
    %c0_i32_5 = arith.constant 0 : i32
    %12 = arith.cmpi eq, %arg1, %c0_i32_5 : i32
    %13 = arith.extui %12 : i1 to i32
    %c0_i32_6 = arith.constant 0 : i32
    %14 = arith.cmpi ne, %13, %c0_i32_6 : i32
    scf.if %14 {
      %c0_7 = arith.constant 0 : index
      %c0_8 = arith.constant 0 : index
      %15 = vector.load %arg6[%c0_7, %c0_8] : memref<128x128xf32, #tpu.memory_space<vmem>>, vector<128x128xf32>
      %c0_9 = arith.constant 0 : index
      %c0_10 = arith.constant 0 : index
      %16 = vector.load %arg4[%c0_9, %c0_10] : memref<1x128xf32, #tpu.memory_space<vmem>>, vector<1x128xf32>
      %17 = vector.broadcast %16 : vector<1x128xf32> to vector<128x128xf32>
      %18 = arith.addf %15, %17 : vector<128x128xf32>
      %c0_11 = arith.constant 0 : index
      %c0_12 = arith.constant 0 : index
      %19 = vector.load %arg5[%c0_11, %c0_12] : memref<128x128xf32, #tpu.memory_space<vmem>>, vector<128x128xf32>
      tpu.vector_store %arg5[%c0_11, %c0_12], %18 {strides = array<i32>} : memref<128x128xf32, #tpu.memory_space<vmem>>, vector<128x128xf32>,
    } else {
    }
    return
  }
  func.func @transform_0(%arg0: i32, %arg1: i32) -> (i32, i32) {
    %c0_i32 = arith.constant 0 : i32
    return %arg0, %arg1 : i32, i32
  }
  func.func @transform_1(%arg0: i32, %arg1: i32) -> (i32, i32) {
    %c0_i32 = arith.constant 0 : i32
    %c0_i32_0 = arith.constant 0 : i32
    %c0_i32_1 = arith.constant 0 : i32
    return %c0_i32, %c0_i32_0 : i32, i32
  }
  func.func @transform_2(%arg0: i32, %arg1: i32) -> (i32, i32) {
    %c0_i32 = arith.constant 0 : i32
    %c0_i32_0 = arith.constant 0 : i32
    %c0_i32_1 = arith.constant 0 : i32
    return %c0_i32, %c0_i32_0 : i32, i32
  }
  func.func @transform_3(%arg0: i32, %arg1: i32) -> (i32, i32) {
    %c0_i32 = arith.constant 0 : i32
    %c0_i32_0 = arith.constant 0 : i32
    return %arg0, %c0_i32 : i32, i32
  }
}

</mosaic_0001>

<llo_original>
// kernel: encoder_forward.3
$region0: #{encoder_forward.3}
  #allocation0 [shape = 'u32[]', space=smem, size = 0x4, offset = 0x4, fixed_abs, tag = 'smem constant byte address 0x4 - core index']
  #allocation1 [shape = 'u32[144,128]{1,0:T(1,128)}', space=vmem, size = 0x12000, scoped, tag = 'internal scratch']
  %s0 = inlined_call_operand.vmem [shape: bf16[128,128], index: 0, kind: input, shape index: {}]
  %s1 = inlined_call_operand.vmem [shape: bf16[128,128], index: 1, kind: input, shape index: {}]
  %s2 = inlined_call_operand.vmem [shape: bf16[128,128], index: 2, kind: output, shape index: {}]
  %s3 = sld [smem:[#allocation0]]
  $region18: #{encoder_forward.3} parent=0
    _
  %s5 = ssub.s32 1, %s3
  %s6 = scalar_select 0, %s5, %s3
  // Predicated region
  $region2: #{encoder_forward.3} parent=0 // pred_check
    _
  $region3: #{encoder_forward.3} parent=0 // pred_check_branch
    %8 = sbr.rel (0) target = $region5
  $region4: #{encoder_forward.3} parent=0 // pred_region
    _
  $region5: #{encoder_forward.3} parent=0 // pred_fallthru
    _
  // Predicated region
  $region6: #{encoder_forward.3} parent=0 // pred_check
    _
  $region7: #{encoder_forward.3} parent=0 // pred_check_branch
    %10 = sbr.rel (0) target = $region9
  $region8: #{encoder_forward.3} parent=0 // pred_region
    _
  $region9: #{encoder_forward.3} parent=0 // pred_fallthru
    _
  %v12 = vld [vmem:[%s0] sm:$0xf]
  %v13 = vld [vmem:[%s0 + $0x4] sm:$0xf]
  %v14 = vld [vmem:[%s0 + $0x8] sm:$0xf]
  %v15 = vld [vmem:[%s0 + $0xc] sm:$0xf]
  %v16 = vld [vmem:[%s0 + $0x10] sm:$0xf]
  %v17 = vld [vmem:[%s0 + $0x14] sm:$0xf]
  %v18 = vld [vmem:[%s0 + $0x18] sm:$0xf]
  %v19 = vld [vmem:[%s0 + $0x1c] sm:$0xf]
  %v20 = vld [vmem:[%s0 + $0x20] sm:$0xf]
  %v21 = vld [vmem:[%s0 + $0x24] sm:$0xf]
  %v22 = vld [vmem:[%s0 + $0x28] sm:$0xf]
  %v23 = vld [vmem:[%s0 + $0x2c] sm:$0xf]
  %v24 = vld [vmem:[%s0 + $0x30] sm:$0xf]
  %v25 = vld [vmem:[%s0 + $0x34] sm:$0xf]
  %v26 = vld [vmem:[%s0 + $0x38] sm:$0xf]
  %v27 = vld [vmem:[%s0 + $0x3c] sm:$0xf]
  %v28 = vld [vmem:[%s1] sm:$0xf]
  %v29 = vld [vmem:[%s1 + $0x4] sm:$0xf]
  %v30 = vld [vmem:[%s1 + $0x8] sm:$0xf]
  %v31 = vld [vmem:[%s1 + $0xc] sm:$0xf]
  %v32 = vld [vmem:[%s1 + $0x10] sm:$0xf]
  %v33 = vld [vmem:[%s1 + $0x14] sm:$0xf]
  %v34 = vld [vmem:[%s1 + $0x18] sm:$0xf]
  %v35 = vld [vmem:[%s1 + $0x1c] sm:$0xf]
  %v36 = vld [vmem:[%s1 + $0x20] sm:$0xf]
  %v37 = vld [vmem:[%s1 + $0x24] sm:$0xf]
  %v38 = vld [vmem:[%s1 + $0x28] sm:$0xf]
  %v39 = vld [vmem:[%s1 + $0x2c] sm:$0xf]
  %v40 = vld [vmem:[%s1 + $0x30] sm:$0xf]
  %v41 = vld [vmem:[%s1 + $0x34] sm:$0xf]
  %v42 = vld [vmem:[%s1 + $0x38] sm:$0xf]
  %v43 = vld [vmem:[%s1 + $0x3c] sm:$0xf]
  %v60 = vunpack.c.l.b16 %v12
  %v61 = vunpack.c.l.b16 %v13
  %v62 = vunpack.c.l.b16 %v14
  %v63 = vunpack.c.l.b16 %v15
  %v64 = vunpack.c.l.b16 %v16
  %v65 = vunpack.c.l.b16 %v17
  %v66 = vunpack.c.l.b16 %v18
  %v67 = vunpack.c.l.b16 %v19
  %v68 = vunpack.c.l.b16 %v20
  %v69 = vunpack.c.l.b16 %v21
  %v70 = vunpack.c.l.b16 %v22
  %v71 = vunpack.c.l.b16 %v23
  %v72 = vunpack.c.l.b16 %v24
  %v73 = vunpack.c.l.b16 %v25
  %v74 = vunpack.c.l.b16 %v26
  %v75 = vunpack.c.l.b16 %v27
  %v76 = vpack.c.b16 %v61, %v60
  %v77 = vpack.c.b16 %v63, %v62
  %v78 = vpack.c.b16 %v65, %v64
  %v79 = vpack.c.b16 %v67, %v66
  %v80 = vpack.c.b16 %v69, %v68
  %v81 = vpack.c.b16 %v71, %v70
  %v82 = vpack.c.b16 %v73, %v72
  %v83 = vpack.c.b16 %v75, %v74
  %v108 = vunpack.c.l.b16 %v28
  %v109 = vunpack.c.l.b16 %v29
  %v110 = vunpack.c.l.b16 %v30
  %v111 = vunpack.c.l.b16 %v31
  %v112 = vunpack.c.l.b16 %v32
  %v113 = vunpack.c.l.b16 %v33
  %v114 = vunpack.c.l.b16 %v34
  %v115 = vunpack.c.l.b16 %v35
  %v116 = vunpack.c.l.b16 %v36
  %v117 = vunpack.c.l.b16 %v37
  %v118 = vunpack.c.l.b16 %v38
  %v119 = vunpack.c.l.b16 %v39
  %v120 = vunpack.c.l.b16 %v40
  %v121 = vunpack.c.l.b16 %v41
  %v122 = vunpack.c.l.b16 %v42
  %v123 = vunpack.c.l.b16 %v43
  %v124 = vpack.c.b16 %v109, %v108
  %v125 = vpack.c.b16 %v111, %v110
  %v126 = vpack.c.b16 %v113, %v112
  %v127 = vpack.c.b16 %v115, %v114
  %v128 = vpack.c.b16 %v117, %v116
  %v129 = vpack.c.b16 %v119, %v118
  %v130 = vpack.c.b16 %v121, %v120
  %v131 = vpack.c.b16 %v123, %v122
  %140 = vmatprep.subr.bf16.mxu0 0
  %141 = vmatpush1.bf16.msra.mxu0 %v124
  %142 = vmatprep.subr.bf16.mxu0 0
  %143 = vmatpush1.bf16.msra.mxu0 %v125
  %144 = vmatprep.subr.bf16.mxu0 0
  %145 = vmatpush1.bf16.msra.mxu0 %v126
  %146 = vmatprep.subr.bf16.mxu0 0
  %147 = vmatpush1.bf16.msra.mxu0 %v127
  %148 = vmatprep.subr.bf16.mxu0 0
  %149 = vmatpush1.bf16.msra.mxu0 %v128
  %150 = vmatprep.subr.bf16.mxu0 0
  %151 = vmatpush1.bf16.msra.mxu0 %v129
  %152 = vmatprep.subr.bf16.mxu0 0
  %153 = vmatpush1.bf16.msra.mxu0 %v130
  %154 = vmatprep.subr.bf16.mxu0 0
  %155 = vmatpush1.bf16.msra.mxu0 %v131
  %156 = vmatprep.subr.bf16.mxu0 0
  %157 = vmatpush1.bf16.msra.mxu0 0
  %158 = vmatprep.subr.bf16.mxu0 0
  %159 = vmatpush1.bf16.msra.mxu0 0
  %160 = vmatprep.subr.bf16.mxu0 0
  %161 = vmatpush1.bf16.msra.mxu0 0
  %162 = vmatprep.subr.bf16.mxu0 0
  %163 = vmatpush1.bf16.msra.mxu0 0
  %164 = vmatprep.subr.bf16.mxu0 0
  %165 = vmatpush1.bf16.msra.mxu0 0
  %166 = vmatprep.subr.bf16.mxu0 0
  %167 = vmatpush1.bf16.msra.mxu0 0
  %168 = vmatprep.subr.bf16.mxu0 0
  %169 = vmatpush1.bf16.msra.mxu0 0
  %170 = vmatprep.subr.bf16.mxu0 0
  %171 = vmatpush1.bf16.msra.mxu0 0
  %172 = vmatprep.mubr.bf16.mxu0 0
  %173 = vmatmul.mubr.bf16.gmra.mrb[0].mxu0 %v76
  %v174 = vpop.f32.mrb[0].mxu0
  %v175 = vadd.f32 0.0, %v174
  %v176 = vpop.f32.mrb[0].mxu0
  %v177 = vpop.f32.mrb[0].mxu0
  %v178 = vadd.f32 0.0, %v177
  %v179 = vpop.f32.mrb[0].mxu0
  %180 = vmatprep.mubr.bf16.mxu0 0
  %181 = vmatmul.mubr.bf16.gmra.mrb[0].mxu0 %v77
  %v182 = vpop.f32.mrb[0].mxu0
  %v183 = vadd.f32 0.0, %v182
  %v184 = vpop.f32.mrb[0].mxu0
  %v185 = vpop.f32.mrb[0].mxu0
  %v186 = vadd.f32 0.0, %v185
  %v187 = vpop.f32.mrb[0].mxu0
  %188 = vmatprep.mubr.bf16.mxu0 0
  %189 = vmatmul.mubr.bf16.gmra.mrb[0].mxu0 %v78
  %v190 = vpop.f32.mrb[0].mxu0
  %v191 = vadd.f32 0.0, %v190
  %v192 = vpop.f32.mrb[0].mxu0
  %v193 = vpop.f32.mrb[0].mxu0
  %v194 = vadd.f32 0.0, %v193
  %v195 = vpop.f32.mrb[0].mxu0
  %196 = vmatprep.mubr.bf16.mxu0 0
  %197 = vmatmul.mubr.bf16.gmra.mrb[0].mxu0 %v79
  %v198 = vpop.f32.mrb[0].mxu0
  %v199 = vadd.f32 0.0, %v198
  %v200 = vpop.f32.mrb[0].mxu0
  %v201 = vpop.f32.mrb[0].mxu0
  %v202 = vadd.f32 0.0, %v201
  %v203 = vpop.f32.mrb[0].mxu0
  %204 = vmatprep.mubr.bf16.mxu0 0
  %205 = vmatmul.mubr.bf16.gmra.mrb[0].mxu0 %v80
  %v206 = vpop.f32.mrb[0].mxu0
  %v207 = vadd.f32 0.0, %v206
  %v208 = vpop.f32.mrb[0].mxu0
  %v209 = vpop.f32.mrb[0].mxu0
  %v210 = vadd.f32 0.0, %v209
  %v211 = vpop.f32.mrb[0].mxu0
  %212 = vmatprep.mubr.bf16.mxu0 0
  %213 = vmatmul.mubr.bf16.gmra.mrb[0].mxu0 %v81
  %v214 = vpop.f32.mrb[0].mxu0
  %v215 = vadd.f32 0.0, %v214
  %v216 = vpop.f32.mrb[0].mxu0
  %v217 = vpop.f32.mrb[0].mxu0
  %v218 = vadd.f32 0.0, %v217
  %v219 = vpop.f32.mrb[0].mxu0
  %220 = vmatprep.mubr.bf16.mxu0 0
  %221 = vmatmul.mubr.bf16.gmra.mrb[0].mxu0 %v82
  %v222 = vpop.f32.mrb[0].mxu0
  %v223 = vadd.f32 0.0, %v222
  %v224 = vpop.f32.mrb[0].mxu0
  %v225 = vpop.f32.mrb[0].mxu0
  %v226 = vadd.f32 0.0, %v225
  %v227 = vpop.f32.mrb[0].mxu0
  %228 = vmatprep.mubr.bf16.mxu0 0
  %229 = vmatmul.mubr.bf16.gmra.mrb[0].mxu0 %v83
  %v230 = vpop.f32.mrb[0].mxu0
  %v231 = vadd.f32 0.0, %v230
  %v232 = vpop.f32.mrb[0].mxu0
  %v233 = vpop.f32.mrb[0].mxu0
  %v234 = vadd.f32 0.0, %v233
  %v235 = vpop.f32.mrb[0].mxu0
  %236 = vdwg.mxu0
  %v237 = vpack.c.bf16 %v178, %v175
  %v238 = vpack.c.bf16 %v186, %v183
  %v239 = vpack.c.bf16 %v194, %v191
  %v240 = vpack.c.bf16 %v202, %v199
  %v241 = vpack.c.bf16 %v210, %v207
  %v242 = vpack.c.bf16 %v218, %v215
  %v243 = vpack.c.bf16 %v226, %v223
  %v244 = vpack.c.bf16 %v234, %v231
  %v253 = vunpack.c.l.b16 %v237
  %v254 = vunpack.c.h.b16 %v237
  %v255 = vunpack.c.l.b16 %v238
  %v256 = vunpack.c.h.b16 %v238
  %v257 = vunpack.c.l.b16 %v239
  %v258 = vunpack.c.h.b16 %v239
  %v259 = vunpack.c.l.b16 %v240
  %v260 = vunpack.c.h.b16 %v240
  %v261 = vunpack.c.l.b16 %v241
  %v262 = vunpack.c.h.b16 %v241
  %v263 = vunpack.c.l.b16 %v242
  %v264 = vunpack.c.h.b16 %v242
  %v265 = vunpack.c.l.b16 %v243
  %v266 = vunpack.c.h.b16 %v243
  %v267 = vunpack.c.l.b16 %v244
  %v268 = vunpack.c.h.b16 %v244
  %v269 = vpack.c.b16 %v253, %v253
  %v270 = vpack.c.b16 %v254, %v254
  %v271 = vpack.c.b16 %v255, %v255
  %v272 = vpack.c.b16 %v256, %v256
  %v273 = vpack.c.b16 %v257, %v257
  %v274 = vpack.c.b16 %v258, %v258
  %v275 = vpack.c.b16 %v259, %v259
  %v276 = vpack.c.b16 %v260, %v260
  %v277 = vpack.c.b16 %v261, %v261
  %v278 = vpack.c.b16 %v262, %v262
  %v279 = vpack.c.b16 %v263, %v263
  %v280 = vpack.c.b16 %v264, %v264
  %v281 = vpack.c.b16 %v265, %v265
  %v282 = vpack.c.b16 %v266, %v266
  %v283 = vpack.c.b16 %v267, %v267
  %v284 = vpack.c.b16 %v268, %v268
  %301 = vst [vmem:[%s2] sm:$0xf] %v269
  %302 = vst [vmem:[%s2 + $0x4] sm:$0xf] %v270
  %303 = vst [vmem:[%s2 + $0x8] sm:$0xf] %v271
  %304 = vst [vmem:[%s2 + $0xc] sm:$0xf] %v272
  %305 = vst [vmem:[%s2 + $0x10] sm:$0xf] %v273
  %306 = vst [vmem:[%s2 + $0x14] sm:$0xf] %v274
  %307 = vst [vmem:[%s2 + $0x18] sm:$0xf] %v275
  %308 = vst [vmem:[%s2 + $0x1c] sm:$0xf] %v276
  %309 = vst [vmem:[%s2 + $0x20] sm:$0xf] %v277
  %310 = vst [vmem:[%s2 + $0x24] sm:$0xf] %v278
  %311 = vst [vmem:[%s2 + $0x28] sm:$0xf] %v279
  %312 = vst [vmem:[%s2 + $0x2c] sm:$0xf] %v280
  %313 = vst [vmem:[%s2 + $0x30] sm:$0xf] %v281
  %314 = vst [vmem:[%s2 + $0x34] sm:$0xf] %v282
  %315 = vst [vmem:[%s2 + $0x38] sm:$0xf] %v283
  %316 = vst [vmem:[%s2 + $0x3c] sm:$0xf] %v284
  // Predicated region
  $region10: #{encoder_forward.3} parent=0 // pred_check
    _
  $region11: #{encoder_forward.3} parent=0 // pred_check_branch
    %318 = sbr.rel (0) target = $region13
  $region12: #{encoder_forward.3} parent=0 // pred_region
    _
  $region13: #{encoder_forward.3} parent=0 // pred_fallthru
    _
  // Predicated region
  $region14: #{encoder_forward.3} parent=0 // pred_check
    _
  $region15: #{encoder_forward.3} parent=0 // pred_check_branch
    %320 = sbr.rel (0) target = $region17
  $region16: #{encoder_forward.3} parent=0 // pred_region
    _
  $region17: #{encoder_forward.3} parent=0 // pred_fallthru
    _

// kernel: encoder_forward.5
$region0: #{encoder_forward.5}
  #allocation0 [shape = 'u32[]', space=smem, size = 0x4, offset = 0x4, fixed_abs, tag = 'smem constant byte address 0x4 - core index']
  #allocation1 [shape = 'u32[144,128]{1,0:T(1,128)}', space=vmem, size = 0x12000, scoped, tag = 'internal scratch']
  #allocation2 [shape = 'f32[128,128]{1,0:T(8,128)}', space=vmem, size = 0x10000, scoped, tag = 'scratch operand']
  %s0 = inlined_call_operand.vmem [shape: bf16[128,128], index: 0, kind: input, shape index: {}]
  %s1 = inlined_call_operand.vmem [shape: bf16[128,128], index: 1, kind: input, shape index: {}]
  %s2 = inlined_call_operand.vmem [shape: f32[1,128], index: 2, kind: input, shape index: {}]
  %s3 = inlined_call_operand.vmem [shape: f32[128,128], index: 3, kind: output, shape index: {}]
  %s4 = sld [smem:[#allocation0]]
  $region34: #{encoder_forward.5} parent=0
    _
  %s6 = ssub.s32 1, %s4
  %s7 = scalar_select 0, %s6, %s4
  // Predicated region
  $region2: #{encoder_forward.5} parent=0 // pred_check
    _
  $region3: #{encoder_forward.5} parent=0 // pred_check_branch
    %9 = sbr.rel (0) target = $region5
  $region4: #{encoder_forward.5} parent=0 // pred_region
    _
  $region5: #{encoder_forward.5} parent=0 // pred_fallthru
    _
  // Predicated region
  $region6: #{encoder_forward.5} parent=0 // pred_check
    _
  $region7: #{encoder_forward.5} parent=0 // pred_check_branch
    %11 = sbr.rel (0) target = $region9
  $region8: #{encoder_forward.5} parent=0 // pred_region
    _
  $region9: #{encoder_forward.5} parent=0 // pred_fallthru
    _
  // Predicated region
  $region10: #{encoder_forward.5} parent=0 // pred_check
    _
  $region11: #{encoder_forward.5} parent=0 // pred_check_branch
    %13 = sbr.rel (0) target = $region13
  $region12: #{encoder_forward.5} parent=0 // pred_region
    _
  $region13: #{encoder_forward.5} parent=0 // pred_fallthru
    _
  %s15 = smul.u32 0, 128
  %s16 = sshra.s32 %s15, 3
  %s17 = sand.u32 %s15, 7
  %s18 = smul.addr %s16, 4
  %s19 = scalar_lea.vmem %s1, %s18
  %v20 = vld [vmem:[%s19] sm:$0xf]
  %v21 = vld [vmem:[%s19 + $0x4] sm:$0xf]
  %v22 = vld [vmem:[%s19 + $0x8] sm:$0xf]
  %v23 = vld [vmem:[%s19 + $0xc] sm:$0xf]
  %v24 = vld [vmem:[%s19 + $0x10] sm:$0xf]
  %v25 = vld [vmem:[%s19 + $0x14] sm:$0xf]
  %v26 = vld [vmem:[%s19 + $0x18] sm:$0xf]
  %v27 = vld [vmem:[%s19 + $0x1c] sm:$0xf]
  %v28 = vld [vmem:[%s19 + $0x20] sm:$0xf]
  %v29 = vld [vmem:[%s19 + $0x24] sm:$0xf]
  %v30 = vld [vmem:[%s19 + $0x28] sm:$0xf]
  %v31 = vld [vmem:[%s19 + $0x2c] sm:$0xf]
  %v32 = vld [vmem:[%s19 + $0x30] sm:$0xf]
  %v33 = vld [vmem:[%s19 + $0x34] sm:$0xf]
  %v34 = vld [vmem:[%s19 + $0x38] sm:$0xf]
  %v35 = vld [vmem:[%s19 + $0x3c] sm:$0xf]
  %v36 = vld [vmem:[%s0] sm:$0xf]
  %v37 = vld [vmem:[%s0 + $0x4] sm:$0xf]
  %v38 = vld [vmem:[%s0 + $0x8] sm:$0xf]
  %v39 = vld [vmem:[%s0 + $0xc] sm:$0xf]
  %v40 = vld [vmem:[%s0 + $0x10] sm:$0xf]
  %v41 = vld [vmem:[%s0 + $0x14] sm:$0xf]
  %v42 = vld [vmem:[%s0 + $0x18] sm:$0xf]
  %v43 = vld [vmem:[%s0 + $0x1c] sm:$0xf]
  %v44 = vld [vmem:[%s0 + $0x20] sm:$0xf]
  %v45 = vld [vmem:[%s0 + $0x24] sm:$0xf]
  %v46 = vld [vmem:[%s0 + $0x28] sm:$0xf]
  %v47 = vld [vmem:[%s0 + $0x2c] sm:$0xf]
  %v48 = vld [vmem:[%s0 + $0x30] sm:$0xf]
  %v49 = vld [vmem:[%s0 + $0x34] sm:$0xf]
  %v50 = vld [vmem:[%s0 + $0x38] sm:$0xf]
  %v51 = vld [vmem:[%s0 + $0x3c] sm:$0xf]
  %v68 = vunpack.c.l.b16 %v36
  %v69 = vunpack.c.l.b16 %v37
  %v70 = vunpack.c.l.b16 %v38
  %v71 = vunpack.c.l.b16 %v39
  %v72 = vunpack.c.l.b16 %v40
  %v73 = vunpack.c.l.b16 %v41
  %v74 = vunpack.c.l.b16 %v42
  %v75 = vunpack.c.l.b16 %v43
  %v76 = vunpack.c.l.b16 %v44
  %v77 = vunpack.c.l.b16 %v45
  %v78 = vunpack.c.l.b16 %v46
  %v79 = vunpack.c.l.b16 %v47
  %v80 = vunpack.c.l.b16 %v48
  %v81 = vunpack.c.l.b16 %v49
  %v82 = vunpack.c.l.b16 %v50
  %v83 = vunpack.c.l.b16 %v51
  %v84 = vpack.c.b16 %v69, %v68
  %v85 = vpack.c.b16 %v71, %v70
  %v86 = vpack.c.b16 %v73, %v72
  %v87 = vpack.c.b16 %v75, %v74
  %v88 = vpack.c.b16 %v77, %v76
  %v89 = vpack.c.b16 %v79, %v78
  %v90 = vpack.c.b16 %v81, %v80
  %v91 = vpack.c.b16 %v83, %v82
  %v116 = vunpack.c.l.b16 %v20
  %v117 = vunpack.c.l.b16 %v21
  %v118 = vunpack.c.l.b16 %v22
  %v119 = vunpack.c.l.b16 %v23
  %v120 = vunpack.c.l.b16 %v24
  %v121 = vunpack.c.l.b16 %v25
  %v122 = vunpack.c.l.b16 %v26
  %v123 = vunpack.c.l.b16 %v27
  %v124 = vunpack.c.l.b16 %v28
  %v125 = vunpack.c.l.b16 %v29
  %v126 = vunpack.c.l.b16 %v30
  %v127 = vunpack.c.l.b16 %v31
  %v128 = vunpack.c.l.b16 %v32
  %v129 = vunpack.c.l.b16 %v33
  %v130 = vunpack.c.l.b16 %v34
  %v131 = vunpack.c.l.b16 %v35
  %v132 = vpack.c.b16 %v117, %v116
  %v133 = vpack.c.b16 %v119, %v118
  %v134 = vpack.c.b16 %v121, %v120
  %v135 = vpack.c.b16 %v123, %v122
  %v136 = vpack.c.b16 %v125, %v124
  %v137 = vpack.c.b16 %v127, %v126
  %v138 = vpack.c.b16 %v129, %v128
  %v139 = vpack.c.b16 %v131, %v130
  %148 = vmatprep.subr.bf16.mxu0 0
  %149 = vmatpush1.bf16.msra.mxu0 %v132
  %150 = vmatprep.subr.bf16.mxu0 0
  %151 = vmatpush1.bf16.msra.mxu0 %v133
  %152 = vmatprep.subr.bf16.mxu0 0
  %153 = vmatpush1.bf16.msra.mxu0 %v134
  %154 = vmatprep.subr.bf16.mxu0 0
  %155 = vmatpush1.bf16.msra.mxu0 %v135
  %156 = vmatprep.subr.bf16.mxu0 0
  %157 = vmatpush1.bf16.msra.mxu0 %v136
  %158 = vmatprep.subr.bf16.mxu0 0
  %159 = vmatpush1.bf16.msra.mxu0 %v137
  %160 = vmatprep.subr.bf16.mxu0 0
  %161 = vmatpush1.bf16.msra.mxu0 %v138
  %162 = vmatprep.subr.bf16.mxu0 0
  %163 = vmatpush1.bf16.msra.mxu0 %v139
  %164 = vmatprep.subr.bf16.mxu0 0
  %165 = vmatpush1.bf16.msra.mxu0 0
  %166 = vmatprep.subr.bf16.mxu0 0
  %167 = vmatpush1.bf16.msra.mxu0 0
  %168 = vmatprep.subr.bf16.mxu0 0
  %169 = vmatpush1.bf16.msra.mxu0 0
  %170 = vmatprep.subr.bf16.mxu0 0
  %171 = vmatpush1.bf16.msra.mxu0 0
  %172 = vmatprep.subr.bf16.mxu0 0
  %173 = vmatpush1.bf16.msra.mxu0 0
  %174 = vmatprep.subr.bf16.mxu0 0
  %175 = vmatpush1.bf16.msra.mxu0 0
  %176 = vmatprep.subr.bf16.mxu0 0
  %177 = vmatpush1.bf16.msra.mxu0 0
  %178 = vmatprep.subr.bf16.mxu0 0
  %179 = vmatpush1.bf16.msra.mxu0 0
  %180 = vmatprep.mubr.bf16.mxu0 0
  %181 = vmatmul.mubr.bf16.gmra.mrb[0].mxu0 %v84
  %v182 = vpop.f32.mrb[0].mxu0
  %v183 = vadd.f32 0.0, %v182
  %v184 = vpop.f32.mrb[0].mxu0
  %v185 = vpop.f32.mrb[0].mxu0
  %v186 = vadd.f32 0.0, %v185
  %v187 = vpop.f32.mrb[0].mxu0
  %188 = vmatprep.mubr.bf16.mxu0 0
  %189 = vmatmul.mubr.bf16.gmra.mrb[0].mxu0 %v85
  %v190 = vpop.f32.mrb[0].mxu0
  %v191 = vadd.f32 0.0, %v190
  %v192 = vpop.f32.mrb[0].mxu0
  %v193 = vpop.f32.mrb[0].mxu0
  %v194 = vadd.f32 0.0, %v193
  %v195 = vpop.f32.mrb[0].mxu0
  %196 = vmatprep.mubr.bf16.mxu0 0
  %197 = vmatmul.mubr.bf16.gmra.mrb[0].mxu0 %v86
  %v198 = vpop.f32.mrb[0].mxu0
  %v199 = vadd.f32 0.0, %v198
  %v200 = vpop.f32.mrb[0].mxu0
  %v201 = vpop.f32.mrb[0].mxu0
  %v202 = vadd.f32 0.0, %v201
  %v203 = vpop.f32.mrb[0].mxu0
  %204 = vmatprep.mubr.bf16.mxu0 0
  %205 = vmatmul.mubr.bf16.gmra.mrb[0].mxu0 %v87
  %v206 = vpop.f32.mrb[0].mxu0
  %v207 = vadd.f32 0.0, %v206
  %v208 = vpop.f32.mrb[0].mxu0
  %v209 = vpop.f32.mrb[0].mxu0
  %v210 = vadd.f32 0.0, %v209
  %v211 = vpop.f32.mrb[0].mxu0
  %212 = vmatprep.mubr.bf16.mxu0 0
  %213 = vmatmul.mubr.bf16.gmra.mrb[0].mxu0 %v88
  %v214 = vpop.f32.mrb[0].mxu0
  %v215 = vadd.f32 0.0, %v214
  %v216 = vpop.f32.mrb[0].mxu0
  %v217 = vpop.f32.mrb[0].mxu0
  %v218 = vadd.f32 0.0, %v217
  %v219 = vpop.f32.mrb[0].mxu0
  %220 = vmatprep.mubr.bf16.mxu0 0
  %221 = vmatmul.mubr.bf16.gmra.mrb[0].mxu0 %v89
  %v222 = vpop.f32.mrb[0].mxu0
  %v223 = vadd.f32 0.0, %v222
  %v224 = vpop.f32.mrb[0].mxu0
  %v225 = vpop.f32.mrb[0].mxu0
  %v226 = vadd.f32 0.0, %v225
  %v227 = vpop.f32.mrb[0].mxu0
  %228 = vmatprep.mubr.bf16.mxu0 0
  %229 = vmatmul.mubr.bf16.gmra.mrb[0].mxu0 %v90
  %v230 = vpop.f32.mrb[0].mxu0
  %v231 = vadd.f32 0.0, %v230
  %v232 = vpop.f32.mrb[0].mxu0
  %v233 = vpop.f32.mrb[0].mxu0
  %v234 = vadd.f32 0.0, %v233
  %v235 = vpop.f32.mrb[0].mxu0
  %236 = vmatprep.mubr.bf16.mxu0 0
  %237 = vmatmul.mubr.bf16.gmra.mrb[0].mxu0 %v91
  %v238 = vpop.f32.mrb[0].mxu0
  %v239 = vadd.f32 0.0, %v238
  %v240 = vpop.f32.mrb[0].mxu0
  %v241 = vpop.f32.mrb[0].mxu0
  %v242 = vadd.f32 0.0, %v241
  %v243 = vpop.f32.mrb[0].mxu0
  %244 = vdwg.mxu0
  %p245 = scmp.eq.s32.totalorder 0, 0
  // Predicated region
  $region14: #{encoder_forward.5} parent=0 // pred_check
    %p246 = pneg %p245
  $region15: #{encoder_forward.5} parent=0 // pred_check_branch
    %248 = sbr.rel (%p246) target = $region17
  $region16: #{encoder_forward.5} parent=0 // pred_region
    %249 = vst [vmem:[#allocation2] sm:$0xff] %v183
    %250 = vst [vmem:[#allocation2 + $0x8] sm:$0xff] %v186
    %251 = vst [vmem:[#allocation2 + $0x10] sm:$0xff] %v191
    %252 = vst [vmem:[#allocation2 + $0x18] sm:$0xff] %v194
    %253 = vst [vmem:[#allocation2 + $0x20] sm:$0xff] %v199
    %254 = vst [vmem:[#allocation2 + $0x28] sm:$0xff] %v202
    %255 = vst [vmem:[#allocation2 + $0x30] sm:$0xff] %v207
    %256 = vst [vmem:[#allocation2 + $0x38] sm:$0xff] %v210
    %257 = vst [vmem:[#allocation2 + $0x40] sm:$0xff] %v215
    %258 = vst [vmem:[#allocation2 + $0x48] sm:$0xff] %v218
    %259 = vst [vmem:[#allocation2 + $0x50] sm:$0xff] %v223
    %260 = vst [vmem:[#allocation2 + $0x58] sm:$0xff] %v226
    %261 = vst [vmem:[#allocation2 + $0x60] sm:$0xff] %v231
    %262 = vst [vmem:[#allocation2 + $0x68] sm:$0xff] %v234
    %263 = vst [vmem:[#allocation2 + $0x70] sm:$0xff] %v239
    %264 = vst [vmem:[#allocation2 + $0x78] sm:$0xff] %v242
  $region17: #{encoder_forward.5} parent=0 // pred_fallthru
    _
  %p265 = scmp.ne.s32.totalorder 0, 0
  // Predicated region
  $region18: #{encoder_forward.5} parent=0 // pred_check
    %p266 = pneg %p265
  $region19: #{encoder_forward.5} parent=0 // pred_check_branch
    %268 = sbr.rel (%p266) target = $region21
  $region20: #{encoder_forward.5} parent=0 // pred_region
    %v269 = vld [vmem:[#allocation2] sm:$0xff]
    %v270 = vld [vmem:[#allocation2 + $0x8] sm:$0xff]
    %v271 = vld [vmem:[#allocation2 + $0x10] sm:$0xff]
    %v272 = vld [vmem:[#allocation2 + $0x18] sm:$0xff]
    %v273 = vld [vmem:[#allocation2 + $0x20] sm:$0xff]
    %v274 = vld [vmem:[#allocation2 + $0x28] sm:$0xff]
    %v275 = vld [vmem:[#allocation2 + $0x30] sm:$0xff]
    %v276 = vld [vmem:[#allocation2 + $0x38] sm:$0xff]
    %v277 = vld [vmem:[#allocation2 + $0x40] sm:$0xff]
    %v278 = vld [vmem:[#allocation2 + $0x48] sm:$0xff]
    %v279 = vld [vmem:[#allocation2 + $0x50] sm:$0xff]
    %v280 = vld [vmem:[#allocation2 + $0x58] sm:$0xff]
    %v281 = vld [vmem:[#allocation2 + $0x60] sm:$0xff]
    %v282 = vld [vmem:[#allocation2 + $0x68] sm:$0xff]
    %v283 = vld [vmem:[#allocation2 + $0x70] sm:$0xff]
    %v284 = vld [vmem:[#allocation2 + $0x78] sm:$0xff]
    %v285 = vadd.f32 %v269, %v183
    %v286 = vadd.f32 %v270, %v186
    %v287 = vadd.f32 %v271, %v191
    %v288 = vadd.f32 %v272, %v194
    %v289 = vadd.f32 %v273, %v199
    %v290 = vadd.f32 %v274, %v202
    %v291 = vadd.f32 %v275, %v207
    %v292 = vadd.f32 %v276, %v210
    %v293 = vadd.f32 %v277, %v215
    %v294 = vadd.f32 %v278, %v218
    %v295 = vadd.f32 %v279, %v223
    %v296 = vadd.f32 %v280, %v226
    %v297 = vadd.f32 %v281, %v231
    %v298 = vadd.f32 %v282, %v234
    %v299 = vadd.f32 %v283, %v239
    %v300 = vadd.f32 %v284, %v242
    %301 = vst [vmem:[#allocation2] sm:$0xff] %v285
    %302 = vst [vmem:[#allocation2 + $0x8] sm:$0xff] %v286
    %303 = vst [vmem:[#allocation2 + $0x10] sm:$0xff] %v287
    %304 = vst [vmem:[#allocation2 + $0x18] sm:$0xff] %v288
    %305 = vst [vmem:[#allocation2 + $0x20] sm:$0xff] %v289
    %306 = vst [vmem:[#allocation2 + $0x28] sm:$0xff] %v290
    %307 = vst [vmem:[#allocation2 + $0x30] sm:$0xff] %v291
    %308 = vst [vmem:[#allocation2 + $0x38] sm:$0xff] %v292
    %309 = vst [vmem:[#allocation2 + $0x40] sm:$0xff] %v293
    %310 = vst [vmem:[#allocation2 + $0x48] sm:$0xff] %v294
    %311 = vst [vmem:[#allocation2 + $0x50] sm:$0xff] %v295
    %312 = vst [vmem:[#allocation2 + $0x58] sm:$0xff] %v296
    %313 = vst [vmem:[#allocation2 + $0x60] sm:$0xff] %v297
    %314 = vst [vmem:[#allocation2 + $0x68] sm:$0xff] %v298
    %315 = vst [vmem:[#allocation2 + $0x70] sm:$0xff] %v299
    %316 = vst [vmem:[#allocation2 + $0x78] sm:$0xff] %v300
  $region21: #{encoder_forward.5} parent=0 // pred_fallthru
    _
  // Predicated region
  $region22: #{encoder_forward.5} parent=0 // pred_check
    %p317 = pneg %p245
  $region23: #{encoder_forward.5} parent=0 // pred_check_branch
    %319 = sbr.rel (%p317) target = $region25
  $region24: #{encoder_forward.5} parent=0 // pred_region
    %v320 = vld [vmem:[#allocation2] sm:$0xff]
    %v321 = vld [vmem:[#allocation2 + $0x8] sm:$0xff]
    %v322 = vld [vmem:[#allocation2 + $0x10] sm:$0xff]
    %v323 = vld [vmem:[#allocation2 + $0x18] sm:$0xff]
    %v324 = vld [vmem:[#allocation2 + $0x20] sm:$0xff]
    %v325 = vld [vmem:[#allocation2 + $0x28] sm:$0xff]
    %v326 = vld [vmem:[#allocation2 + $0x30] sm:$0xff]
    %v327 = vld [vmem:[#allocation2 + $0x38] sm:$0xff]
    %v328 = vld [vmem:[#allocation2 + $0x40] sm:$0xff]
    %v329 = vld [vmem:[#allocation2 + $0x48] sm:$0xff]
    %v330 = vld [vmem:[#allocation2 + $0x50] sm:$0xff]
    %v331 = vld [vmem:[#allocation2 + $0x58] sm:$0xff]
    %v332 = vld [vmem:[#allocation2 + $0x60] sm:$0xff]
    %v333 = vld [vmem:[#allocation2 + $0x68] sm:$0xff]
    %v334 = vld [vmem:[#allocation2 + $0x70] sm:$0xff]
    %v335 = vld [vmem:[#allocation2 + $0x78] sm:$0xff]
    %v336 = vld [vmem:[%s2] sm:$0x1]
    %v338 = vlaneseq
    %v339 = vshrl.u32 %v338, 7
    %v340 = vsub.s32 0, %v339
    %v341 = vrot.slane %v336, %v340
    %v343 = vadd.f32 %v320, %v341
    %v344 = vadd.f32 %v321, %v341
    %v345 = vadd.f32 %v322, %v341
    %v346 = vadd.f32 %v323, %v341
    %v347 = vadd.f32 %v324, %v341
    %v348 = vadd.f32 %v325, %v341
    %v349 = vadd.f32 %v326, %v341
    %v350 = vadd.f32 %v327, %v341
    %v351 = vadd.f32 %v328, %v341
    %v352 = vadd.f32 %v329, %v341
    %v353 = vadd.f32 %v330, %v341
    %v354 = vadd.f32 %v331, %v341
    %v355 = vadd.f32 %v332, %v341
    %v356 = vadd.f32 %v333, %v341
    %v357 = vadd.f32 %v334, %v341
    %v358 = vadd.f32 %v335, %v341
    %359 = vst [vmem:[%s3] sm:$0xff] %v343
    %360 = vst [vmem:[%s3 + $0x8] sm:$0xff] %v344
    %361 = vst [vmem:[%s3 + $0x10] sm:$0xff] %v345
    %362 = vst [vmem:[%s3 + $0x18] sm:$0xff] %v346
    %363 = vst [vmem:[%s3 + $0x20] sm:$0xff] %v347
    %364 = vst [vmem:[%s3 + $0x28] sm:$0xff] %v348
    %365 = vst [vmem:[%s3 + $0x30] sm:$0xff] %v349
    %366 = vst [vmem:[%s3 + $0x38] sm:$0xff] %v350
    %367 = vst [vmem:[%s3 + $0x40] sm:$0xff] %v351
    %368 = vst [vmem:[%s3 + $0x48] sm:$0xff] %v352
    %369 = vst [vmem:[%s3 + $0x50] sm:$0xff] %v353
    %370 = vst [vmem:[%s3 + $0x58] sm:$0xff] %v354
    %371 = vst [vmem:[%s3 + $0x60] sm:$0xff] %v355
    %372 = vst [vmem:[%s3 + $0x68] sm:$0xff] %v356
    %373 = vst [vmem:[%s3 + $0x70] sm:$0xff] %v357
    %374 = vst [vmem:[%s3 + $0x78] sm:$0xff] %v358
  $region25: #{encoder_forward.5} parent=0 // pred_fallthru
    _
  // Predicated region
  $region26: #{encoder_forward.5} parent=0 // pred_check
    _
  $region27: #{encoder_forward.5} parent=0 // pred_check_branch
    %376 = sbr.rel (0) target = $region29
  $region28: #{encoder_forward.5} parent=0 // pred_region
    _
  $region29: #{encoder_forward.5} parent=0 // pred_fallthru
    _
  // Predicated region
  $region30: #{encoder_forward.5} parent=0 // pred_check
    _
  $region31: #{encoder_forward.5} parent=0 // pred_check_branch
    %378 = sbr.rel (0) target = $region33
  $region32: #{encoder_forward.5} parent=0 // pred_region
    _
  $region33: #{encoder_forward.5} parent=0 // pred_fallthru
    _

// kernel: encoder_forward.4
$region0: #{encoder_forward.4}
  #allocation0 [shape = 'u32[]', space=smem, size = 0x4, offset = 0x4, fixed_abs, tag = 'smem constant byte address 0x4 - core index']
  #allocation1 [shape = 'u32[144,128]{1,0:T(1,128)}', space=vmem, size = 0x12000, scoped, tag = 'internal scratch']
  #allocation2 [shape = 'f32[128,128]{1,0:T(8,128)}', space=vmem, size = 0x10000, scoped, tag = 'scratch operand']
  %s0 = inlined_call_operand.vmem [shape: bf16[128,128], index: 0, kind: input, shape index: {}]
  %s1 = inlined_call_operand.vmem [shape: bf16[128,128], index: 1, kind: input, shape index: {}]
  %s2 = inlined_call_operand.vmem [shape: f32[1,128], index: 2, kind: input, shape index: {}]
  %s3 = inlined_call_operand.vmem [shape: bf16[128,128], index: 3, kind: input, shape index: {}]
  %s4 = inlined_call_operand.vmem [shape: bf16[128,128], index: 4, kind: output, shape index: {}]
  %s5 = sld [smem:[#allocation0]]
  $region38: #{encoder_forward.4} parent=0
    _
  %s7 = ssub.s32 1, %s5
  %s8 = scalar_select 0, %s7, %s5
  // Predicated region
  $region2: #{encoder_forward.4} parent=0 // pred_check
    _
  $region3: #{encoder_forward.4} parent=0 // pred_check_branch
    %10 = sbr.rel (0) target = $region5
  $region4: #{encoder_forward.4} parent=0 // pred_region
    _
  $region5: #{encoder_forward.4} parent=0 // pred_fallthru
    _
  // Predicated region
  $region6: #{encoder_forward.4} parent=0 // pred_check
    _
  $region7: #{encoder_forward.4} parent=0 // pred_check_branch
    %12 = sbr.rel (0) target = $region9
  $region8: #{encoder_forward.4} parent=0 // pred_region
    _
  $region9: #{encoder_forward.4} parent=0 // pred_fallthru
    _
  // Predicated region
  $region10: #{encoder_forward.4} parent=0 // pred_check
    _
  $region11: #{encoder_forward.4} parent=0 // pred_check_branch
    %14 = sbr.rel (0) target = $region13
  $region12: #{encoder_forward.4} parent=0 // pred_region
    _
  $region13: #{encoder_forward.4} parent=0 // pred_fallthru
    _
  // Predicated region
  $region14: #{encoder_forward.4} parent=0 // pred_check
    _
  $region15: #{encoder_forward.4} parent=0 // pred_check_branch
    %16 = sbr.rel (0) target = $region17
  $region16: #{encoder_forward.4} parent=0 // pred_region
    _
  $region17: #{encoder_forward.4} parent=0 // pred_fallthru
    _
  %s18 = smul.u32 0, 128
  %s19 = sshra.s32 %s18, 3
  %s20 = sand.u32 %s18, 7
  %s21 = smul.addr %s19, 4
  %s22 = scalar_lea.vmem %s1, %s21
  %v23 = vld [vmem:[%s22] sm:$0xf]
  %v24 = vld [vmem:[%s22 + $0x4] sm:$0xf]
  %v25 = vld [vmem:[%s22 + $0x8] sm:$0xf]
  %v26 = vld [vmem:[%s22 + $0xc] sm:$0xf]
  %v27 = vld [vmem:[%s22 + $0x10] sm:$0xf]
  %v28 = vld [vmem:[%s22 + $0x14] sm:$0xf]
  %v29 = vld [vmem:[%s22 + $0x18] sm:$0xf]
  %v30 = vld [vmem:[%s22 + $0x1c] sm:$0xf]
  %v31 = vld [vmem:[%s22 + $0x20] sm:$0xf]
  %v32 = vld [vmem:[%s22 + $0x24] sm:$0xf]
  %v33 = vld [vmem:[%s22 + $0x28] sm:$0xf]
  %v34 = vld [vmem:[%s22 + $0x2c] sm:$0xf]
  %v35 = vld [vmem:[%s22 + $0x30] sm:$0xf]
  %v36 = vld [vmem:[%s22 + $0x34] sm:$0xf]
  %v37 = vld [vmem:[%s22 + $0x38] sm:$0xf]
  %v38 = vld [vmem:[%s22 + $0x3c] sm:$0xf]
  %v39 = vld [vmem:[%s0] sm:$0xf]
  %v40 = vld [vmem:[%s0 + $0x4] sm:$0xf]
  %v41 = vld [vmem:[%s0 + $0x8] sm:$0xf]
  %v42 = vld [vmem:[%s0 + $0xc] sm:$0xf]
  %v43 = vld [vmem:[%s0 + $0x10] sm:$0xf]
  %v44 = vld [vmem:[%s0 + $0x14] sm:$0xf]
  %v45 = vld [vmem:[%s0 + $0x18] sm:$0xf]
  %v46 = vld [vmem:[%s0 + $0x1c] sm:$0xf]
  %v47 = vld [vmem:[%s0 + $0x20] sm:$0xf]
  %v48 = vld [vmem:[%s0 + $0x24] sm:$0xf]
  %v49 = vld [vmem:[%s0 + $0x28] sm:$0xf]
  %v50 = vld [vmem:[%s0 + $0x2c] sm:$0xf]
  %v51 = vld [vmem:[%s0 + $0x30] sm:$0xf]
  %v52 = vld [vmem:[%s0 + $0x34] sm:$0xf]
  %v53 = vld [vmem:[%s0 + $0x38] sm:$0xf]
  %v54 = vld [vmem:[%s0 + $0x3c] sm:$0xf]
  %v71 = vunpack.c.l.b16 %v39
  %v72 = vunpack.c.l.b16 %v40
  %v73 = vunpack.c.l.b16 %v41
  %v74 = vunpack.c.l.b16 %v42
  %v75 = vunpack.c.l.b16 %v43
  %v76 = vunpack.c.l.b16 %v44
  %v77 = vunpack.c.l.b16 %v45
  %v78 = vunpack.c.l.b16 %v46
  %v79 = vunpack.c.l.b16 %v47
  %v80 = vunpack.c.l.b16 %v48
  %v81 = vunpack.c.l.b16 %v49
  %v82 = vunpack.c.l.b16 %v50
  %v83 = vunpack.c.l.b16 %v51
  %v84 = vunpack.c.l.b16 %v52
  %v85 = vunpack.c.l.b16 %v53
  %v86 = vunpack.c.l.b16 %v54
  %v87 = vpack.c.b16 %v72, %v71
  %v88 = vpack.c.b16 %v74, %v73
  %v89 = vpack.c.b16 %v76, %v75
  %v90 = vpack.c.b16 %v78, %v77
  %v91 = vpack.c.b16 %v80, %v79
  %v92 = vpack.c.b16 %v82, %v81
  %v93 = vpack.c.b16 %v84, %v83
  %v94 = vpack.c.b16 %v86, %v85
  %v119 = vunpack.c.l.b16 %v23
  %v120 = vunpack.c.l.b16 %v24
  %v121 = vunpack.c.l.b16 %v25
  %v122 = vunpack.c.l.b16 %v26
  %v123 = vunpack.c.l.b16 %v27
  %v124 = vunpack.c.l.b16 %v28
  %v125 = vunpack.c.l.b16 %v29
  %v126 = vunpack.c.l.b16 %v30
  %v127 = vunpack.c.l.b16 %v31
  %v128 = vunpack.c.l.b16 %v32
  %v129 = vunpack.c.l.b16 %v33
  %v130 = vunpack.c.l.b16 %v34
  %v131 = vunpack.c.l.b16 %v35
  %v132 = vunpack.c.l.b16 %v36
  %v133 = vunpack.c.l.b16 %v37
  %v134 = vunpack.c.l.b16 %v38
  %v135 = vpack.c.b16 %v120, %v119
  %v136 = vpack.c.b16 %v122, %v121
  %v137 = vpack.c.b16 %v124, %v123
  %v138 = vpack.c.b16 %v126, %v125
  %v139 = vpack.c.b16 %v128, %v127
  %v140 = vpack.c.b16 %v130, %v129
  %v141 = vpack.c.b16 %v132, %v131
  %v142 = vpack.c.b16 %v134, %v133
  %151 = vmatprep.subr.bf16.mxu0 0
  %152 = vmatpush1.bf16.msra.mxu0 %v135
  %153 = vmatprep.subr.bf16.mxu0 0
  %154 = vmatpush1.bf16.msra.mxu0 %v136
  %155 = vmatprep.subr.bf16.mxu0 0
  %156 = vmatpush1.bf16.msra.mxu0 %v137
  %157 = vmatprep.subr.bf16.mxu0 0
  %158 = vmatpush1.bf16.msra.mxu0 %v138
  %159 = vmatprep.subr.bf16.mxu0 0
  %160 = vmatpush1.bf16.msra.mxu0 %v139
  %161 = vmatprep.subr.bf16.mxu0 0
  %162 = vmatpush1.bf16.msra.mxu0 %v140
  %163 = vmatprep.subr.bf16.mxu0 0
  %164 = vmatpush1.bf16.msra.mxu0 %v141
  %165 = vmatprep.subr.bf16.mxu0 0
  %166 = vmatpush1.bf16.msra.mxu0 %v142
  %167 = vmatprep.subr.bf16.mxu0 0
  %168 = vmatpush1.bf16.msra.mxu0 0
  %169 = vmatprep.subr.bf16.mxu0 0
  %170 = vmatpush1.bf16.msra.mxu0 0
  %171 = vmatprep.subr.bf16.mxu0 0
  %172 = vmatpush1.bf16.msra.mxu0 0
  %173 = vmatprep.subr.bf16.mxu0 0
  %174 = vmatpush1.bf16.msra.mxu0 0
  %175 = vmatprep.subr.bf16.mxu0 0
  %176 = vmatpush1.bf16.msra.mxu0 0
  %177 = vmatprep.subr.bf16.mxu0 0
  %178 = vmatpush1.bf16.msra.mxu0 0
  %179 = vmatprep.subr.bf16.mxu0 0
  %180 = vmatpush1.bf16.msra.mxu0 0
  %181 = vmatprep.subr.bf16.mxu0 0
  %182 = vmatpush1.bf16.msra.mxu0 0
  %183 = vmatprep.mubr.bf16.mxu0 0
  %184 = vmatmul.mubr.bf16.gmra.mrb[0].mxu0 %v87
  %v185 = vpop.f32.mrb[0].mxu0
  %v186 = vadd.f32 0.0, %v185
  %v187 = vpop.f32.mrb[0].mxu0
  %v188 = vpop.f32.mrb[0].mxu0
  %v189 = vadd.f32 0.0, %v188
  %v190 = vpop.f32.mrb[0].mxu0
  %191 = vmatprep.mubr.bf16.mxu0 0
  %192 = vmatmul.mubr.bf16.gmra.mrb[0].mxu0 %v88
  %v193 = vpop.f32.mrb[0].mxu0
  %v194 = vadd.f32 0.0, %v193
  %v195 = vpop.f32.mrb[0].mxu0
  %v196 = vpop.f32.mrb[0].mxu0
  %v197 = vadd.f32 0.0, %v196
  %v198 = vpop.f32.mrb[0].mxu0
  %199 = vmatprep.mubr.bf16.mxu0 0
  %200 = vmatmul.mubr.bf16.gmra.mrb[0].mxu0 %v89
  %v201 = vpop.f32.mrb[0].mxu0
  %v202 = vadd.f32 0.0, %v201
  %v203 = vpop.f32.mrb[0].mxu0
  %v204 = vpop.f32.mrb[0].mxu0
  %v205 = vadd.f32 0.0, %v204
  %v206 = vpop.f32.mrb[0].mxu0
  %207 = vmatprep.mubr.bf16.mxu0 0
  %208 = vmatmul.mubr.bf16.gmra.mrb[0].mxu0 %v90
  %v209 = vpop.f32.mrb[0].mxu0
  %v210 = vadd.f32 0.0, %v209
  %v211 = vpop.f32.mrb[0].mxu0
  %v212 = vpop.f32.mrb[0].mxu0
  %v213 = vadd.f32 0.0, %v212
  %v214 = vpop.f32.mrb[0].mxu0
  %215 = vmatprep.mubr.bf16.mxu0 0
  %216 = vmatmul.mubr.bf16.gmra.mrb[0].mxu0 %v91
  %v217 = vpop.f32.mrb[0].mxu0
  %v218 = vadd.f32 0.0, %v217
  %v219 = vpop.f32.mrb[0].mxu0
  %v220 = vpop.f32.mrb[0].mxu0
  %v221 = vadd.f32 0.0, %v220
  %v222 = vpop.f32.mrb[0].mxu0
  %223 = vmatprep.mubr.bf16.mxu0 0
  %224 = vmatmul.mubr.bf16.gmra.mrb[0].mxu0 %v92
  %v225 = vpop.f32.mrb[0].mxu0
  %v226 = vadd.f32 0.0, %v225
  %v227 = vpop.f32.mrb[0].mxu0
  %v228 = vpop.f32.mrb[0].mxu0
  %v229 = vadd.f32 0.0, %v228
  %v230 = vpop.f32.mrb[0].mxu0
  %231 = vmatprep.mubr.bf16.mxu0 0
  %232 = vmatmul.mubr.bf16.gmra.mrb[0].mxu0 %v93
  %v233 = vpop.f32.mrb[0].mxu0
  %v234 = vadd.f32 0.0, %v233
  %v235 = vpop.f32.mrb[0].mxu0
  %v236 = vpop.f32.mrb[0].mxu0
  %v237 = vadd.f32 0.0, %v236
  %v238 = vpop.f32.mrb[0].mxu0
  %239 = vmatprep.mubr.bf16.mxu0 0
  %240 = vmatmul.mubr.bf16.gmra.mrb[0].mxu0 %v94
  %v241 = vpop.f32.mrb[0].mxu0
  %v242 = vadd.f32 0.0, %v241
  %v243 = vpop.f32.mrb[0].mxu0
  %v244 = vpop.f32.mrb[0].mxu0
  %v245 = vadd.f32 0.0, %v244
  %v246 = vpop.f32.mrb[0].mxu0
  %247 = vdwg.mxu0
  %p248 = scmp.eq.s32.totalorder 0, 0
  // Predicated region
  $region18: #{encoder_forward.4} parent=0 // pred_check
    %p249 = pneg %p248
  $region19: #{encoder_forward.4} parent=0 // pred_check_branch
    %251 = sbr.rel (%p249) target = $region21
  $region20: #{encoder_forward.4} parent=0 // pred_region
    %252 = vst [vmem:[#allocation2] sm:$0xff] %v186
    %253 = vst [vmem:[#allocation2 + $0x8] sm:$0xff] %v189
    %254 = vst [vmem:[#allocation2 + $0x10] sm:$0xff] %v194
    %255 = vst [vmem:[#allocation2 + $0x18] sm:$0xff] %v197
    %256 = vst [vmem:[#allocation2 + $0x20] sm:$0xff] %v202
    %257 = vst [vmem:[#allocation2 + $0x28] sm:$0xff] %v205
    %258 = vst [vmem:[#allocation2 + $0x30] sm:$0xff] %v210
    %259 = vst [vmem:[#allocation2 + $0x38] sm:$0xff] %v213
    %260 = vst [vmem:[#allocation2 + $0x40] sm:$0xff] %v218
    %261 = vst [vmem:[#allocation2 + $0x48] sm:$0xff] %v221
    %262 = vst [vmem:[#allocation2 + $0x50] sm:$0xff] %v226
    %263 = vst [vmem:[#allocation2 + $0x58] sm:$0xff] %v229
    %264 = vst [vmem:[#allocation2 + $0x60] sm:$0xff] %v234
    %265 = vst [vmem:[#allocation2 + $0x68] sm:$0xff] %v237
    %266 = vst [vmem:[#allocation2 + $0x70] sm:$0xff] %v242
    %267 = vst [vmem:[#allocation2 + $0x78] sm:$0xff] %v245
  $region21: #{encoder_forward.4} parent=0 // pred_fallthru
    _
  %p268 = scmp.ne.s32.totalorder 0, 0
  // Predicated region
  $region22: #{encoder_forward.4} parent=0 // pred_check
    %p269 = pneg %p268
  $region23: #{encoder_forward.4} parent=0 // pred_check_branch
    %271 = sbr.rel (%p269) target = $region25
  $region24: #{encoder_forward.4} parent=0 // pred_region
    %v272 = vld [vmem:[#allocation2] sm:$0xff]
    %v273 = vld [vmem:[#allocation2 + $0x8] sm:$0xff]
    %v274 = vld [vmem:[#allocation2 + $0x10] sm:$0xff]
    %v275 = vld [vmem:[#allocation2 + $0x18] sm:$0xff]
    %v276 = vld [vmem:[#allocation2 + $0x20] sm:$0xff]
    %v277 = vld [vmem:[#allocation2 + $0x28] sm:$0xff]
    %v278 = vld [vmem:[#allocation2 + $0x30] sm:$0xff]
    %v279 = vld [vmem:[#allocation2 + $0x38] sm:$0xff]
    %v280 = vld [vmem:[#allocation2 + $0x40] sm:$0xff]
    %v281 = vld [vmem:[#allocation2 + $0x48] sm:$0xff]
    %v282 = vld [vmem:[#allocation2 + $0x50] sm:$0xff]
    %v283 = vld [vmem:[#allocation2 + $0x58] sm:$0xff]
    %v284 = vld [vmem:[#allocation2 + $0x60] sm:$0xff]
    %v285 = vld [vmem:[#allocation2 + $0x68] sm:$0xff]
    %v286 = vld [vmem:[#allocation2 + $0x70] sm:$0xff]
    %v287 = vld [vmem:[#allocation2 + $0x78] sm:$0xff]
    %v288 = vadd.f32 %v272, %v186
    %v289 = vadd.f32 %v273, %v189
    %v290 = vadd.f32 %v274, %v194
    %v291 = vadd.f32 %v275, %v197
    %v292 = vadd.f32 %v276, %v202
    %v293 = vadd.f32 %v277, %v205
    %v294 = vadd.f32 %v278, %v210
    %v295 = vadd.f32 %v279, %v213
    %v296 = vadd.f32 %v280, %v218
    %v297 = vadd.f32 %v281, %v221
    %v298 = vadd.f32 %v282, %v226
    %v299 = vadd.f32 %v283, %v229
    %v300 = vadd.f32 %v284, %v234
    %v301 = vadd.f32 %v285, %v237
    %v302 = vadd.f32 %v286, %v242
    %v303 = vadd.f32 %v287, %v245
    %304 = vst [vmem:[#allocation2] sm:$0xff] %v288
    %305 = vst [vmem:[#allocation2 + $0x8] sm:$0xff] %v289
    %306 = vst [vmem:[#allocation2 + $0x10] sm:$0xff] %v290
    %307 = vst [vmem:[#allocation2 + $0x18] sm:$0xff] %v291
    %308 = vst [vmem:[#allocation2 + $0x20] sm:$0xff] %v292
    %309 = vst [vmem:[#allocation2 + $0x28] sm:$0xff] %v293
    %310 = vst [vmem:[#allocation2 + $0x30] sm:$0xff] %v294
    %311 = vst [vmem:[#allocation2 + $0x38] sm:$0xff] %v295
    %312 = vst [vmem:[#allocation2 + $0x40] sm:$0xff] %v296
    %313 = vst [vmem:[#allocation2 + $0x48] sm:$0xff] %v297
    %314 = vst [vmem:[#allocation2 + $0x50] sm:$0xff] %v298
    %315 = vst [vmem:[#allocation2 + $0x58] sm:$0xff] %v299
    %316 = vst [vmem:[#allocation2 + $0x60] sm:$0xff] %v300
    %317 = vst [vmem:[#allocation2 + $0x68] sm:$0xff] %v301
    %318 = vst [vmem:[#allocation2 + $0x70] sm:$0xff] %v302
    %319 = vst [vmem:[#allocation2 + $0x78] sm:$0xff] %v303
  $region25: #{encoder_forward.4} parent=0 // pred_fallthru
    _
  // Predicated region
  $region26: #{encoder_forward.4} parent=0 // pred_check
    %p320 = pneg %p248
  $region27: #{encoder_forward.4} parent=0 // pred_check_branch
    %322 = sbr.rel (%p320) target = $region29
  $region28: #{encoder_forward.4} parent=0 // pred_region
    %v323 = vld [vmem:[#allocation2] sm:$0xff]
    %v324 = vld [vmem:[#allocation2 + $0x8] sm:$0xff]
    %v325 = vld [vmem:[#allocation2 + $0x10] sm:$0xff]
    %v326 = vld [vmem:[#allocation2 + $0x18] sm:$0xff]
    %v327 = vld [vmem:[#allocation2 + $0x20] sm:$0xff]
    %v328 = vld [vmem:[#allocation2 + $0x28] sm:$0xff]
    %v329 = vld [vmem:[#allocation2 + $0x30] sm:$0xff]
    %v330 = vld [vmem:[#allocation2 + $0x38] sm:$0xff]
    %v331 = vld [vmem:[#allocation2 + $0x40] sm:$0xff]
    %v332 = vld [vmem:[#allocation2 + $0x48] sm:$0xff]
    %v333 = vld [vmem:[#allocation2 + $0x50] sm:$0xff]
    %v334 = vld [vmem:[#allocation2 + $0x58] sm:$0xff]
    %v335 = vld [vmem:[#allocation2 + $0x60] sm:$0xff]
    %v336 = vld [vmem:[#allocation2 + $0x68] sm:$0xff]
    %v337 = vld [vmem:[#allocation2 + $0x70] sm:$0xff]
    %v338 = vld [vmem:[#allocation2 + $0x78] sm:$0xff]
    %v339 = vld [vmem:[%s2] sm:$0x1]
    %v341 = vlaneseq
    %v342 = vshrl.u32 %v341, 7
    %v343 = vsub.s32 0, %v342
    %v344 = vrot.slane %v339, %v343
    %v346 = vadd.f32 %v323, %v344
    %v347 = vadd.f32 %v324, %v344
    %v348 = vadd.f32 %v325, %v344
    %v349 = vadd.f32 %v326, %v344
    %v350 = vadd.f32 %v327, %v344
    %v351 = vadd.f32 %v328, %v344
    %v352 = vadd.f32 %v329, %v344
    %v353 = vadd.f32 %v330, %v344
    %v354 = vadd.f32 %v331, %v344
    %v355 = vadd.f32 %v332, %v344
    %v356 = vadd.f32 %v333, %v344
    %v357 = vadd.f32 %v334, %v344
    %v358 = vadd.f32 %v335, %v344
    %v359 = vadd.f32 %v336, %v344
    %v360 = vadd.f32 %v337, %v344
    %v361 = vadd.f32 %v338, %v344
    %v362 = vmax.f32 %v346, 0.0
    %v363 = vmax.f32 %v347, 0.0
    %v364 = vmax.f32 %v348, 0.0
    %v365 = vmax.f32 %v349, 0.0
    %v366 = vmax.f32 %v350, 0.0
    %v367 = vmax.f32 %v351, 0.0
    %v368 = vmax.f32 %v352, 0.0
    %v369 = vmax.f32 %v353, 0.0
    %v370 = vmax.f32 %v354, 0.0
    %v371 = vmax.f32 %v355, 0.0
    %v372 = vmax.f32 %v356, 0.0
    %v373 = vmax.f32 %v357, 0.0
    %v374 = vmax.f32 %v358, 0.0
    %v375 = vmax.f32 %v359, 0.0
    %v376 = vmax.f32 %v360, 0.0
    %v377 = vmax.f32 %v361, 0.0
    %v378 = vpack.c.bf16 %v363, %v362
    %v379 = vpack.c.bf16 %v365, %v364
    %v380 = vpack.c.bf16 %v367, %v366
    %v381 = vpack.c.bf16 %v369, %v368
    %v382 = vpack.c.bf16 %v371, %v370
    %v383 = vpack.c.bf16 %v373, %v372
    %v384 = vpack.c.bf16 %v375, %v374
    %v385 = vpack.c.bf16 %v377, %v376
    %v386 = vld [vmem:[%s3] sm:$0xf]
    %v387 = vld [vmem:[%s3 + $0x4] sm:$0xf]
    %v388 = vld [vmem:[%s3 + $0x8] sm:$0xf]
    %v389 = vld [vmem:[%s3 + $0xc] sm:$0xf]
    %v390 = vld [vmem:[%s3 + $0x10] sm:$0xf]
    %v391 = vld [vmem:[%s3 + $0x14] sm:$0xf]
    %v392 = vld [vmem:[%s3 + $0x18] sm:$0xf]
    %v393 = vld [vmem:[%s3 + $0x1c] sm:$0xf]
    %v394 = vld [vmem:[%s3 + $0x20] sm:$0xf]
    %v395 = vld [vmem:[%s3 + $0x24] sm:$0xf]
    %v396 = vld [vmem:[%s3 + $0x28] sm:$0xf]
    %v397 = vld [vmem:[%s3 + $0x2c] sm:$0xf]
    %v398 = vld [vmem:[%s3 + $0x30] sm:$0xf]
    %v399 = vld [vmem:[%s3 + $0x34] sm:$0xf]
    %v400 = vld [vmem:[%s3 + $0x38] sm:$0xf]
    %v401 = vld [vmem:[%s3 + $0x3c] sm:$0xf]
    %v418 = vunpack.c.l.b16 %v386
    %v419 = vunpack.c.l.b16 %v387
    %v420 = vunpack.c.l.b16 %v388
    %v421 = vunpack.c.l.b16 %v389
    %v422 = vunpack.c.l.b16 %v390
    %v423 = vunpack.c.l.b16 %v391
    %v424 = vunpack.c.l.b16 %v392
    %v425 = vunpack.c.l.b16 %v393
    %v426 = vunpack.c.l.b16 %v394
    %v427 = vunpack.c.l.b16 %v395
    %v428 = vunpack.c.l.b16 %v396
    %v429 = vunpack.c.l.b16 %v397
    %v430 = vunpack.c.l.b16 %v398
    %v431 = vunpack.c.l.b16 %v399
    %v432 = vunpack.c.l.b16 %v400
    %v433 = vunpack.c.l.b16 %v401
    %v434 = vpack.c.b16 %v419, %v418
    %v435 = vpack.c.b16 %v421, %v420
    %v436 = vpack.c.b16 %v423, %v422
    %v437 = vpack.c.b16 %v425, %v424
    %v438 = vpack.c.b16 %v427, %v426
    %v439 = vpack.c.b16 %v429, %v428
    %v440 = vpack.c.b16 %v431, %v430
    %v441 = vpack.c.b16 %v433, %v432
    %450 = vmatprep.subr.bf16.mxu0 0
    %451 = vmatpush1.bf16.msra.mxu0 %v434
    %452 = vmatprep.subr.bf16.mxu0 0
    %453 = vmatpush1.bf16.msra.mxu0 %v435
    %454 = vmatprep.subr.bf16.mxu0 0
    %455 = vmatpush1.bf16.msra.mxu0 %v436
    %456 = vmatprep.subr.bf16.mxu0 0
    %457 = vmatpush1.bf16.msra.mxu0 %v437
    %458 = vmatprep.subr.bf16.mxu0 0
    %459 = vmatpush1.bf16.msra.mxu0 %v438
    %460 = vmatprep.subr.bf16.mxu0 0
    %461 = vmatpush1.bf16.msra.mxu0 %v439
    %462 = vmatprep.subr.bf16.mxu0 0
    %463 = vmatpush1.bf16.msra.mxu0 %v440
    %464 = vmatprep.subr.bf16.mxu0 0
    %465 = vmatpush1.bf16.msra.mxu0 %v441
    %466 = vmatprep.subr.bf16.mxu0 0
    %467 = vmatpush1.bf16.msra.mxu0 0
    %468 = vmatprep.subr.bf16.mxu0 0
    %469 = vmatpush1.bf16.msra.mxu0 0
    %470 = vmatprep.subr.bf16.mxu0 0
    %471 = vmatpush1.bf16.msra.mxu0 0
    %472 = vmatprep.subr.bf16.mxu0 0
    %473 = vmatpush1.bf16.msra.mxu0 0
    %474 = vmatprep.subr.bf16.mxu0 0
    %475 = vmatpush1.bf16.msra.mxu0 0
    %476 = vmatprep.subr.bf16.mxu0 0
    %477 = vmatpush1.bf16.msra.mxu0 0
    %478 = vmatprep.subr.bf16.mxu0 0
    %479 = vmatpush1.bf16.msra.mxu0 0
    %480 = vmatprep.subr.bf16.mxu0 0
    %481 = vmatpush1.bf16.msra.mxu0 0
    %482 = vmatprep.mubr.bf16.mxu0 0
    %483 = vmatmul.mubr.bf16.gmra.mrb[0].mxu0 %v378
    %v484 = vpop.f32.mrb[0].mxu0
    %v485 = vadd.f32 0.0, %v484
    %v486 = vpop.f32.mrb[0].mxu0
    %v487 = vpop.f32.mrb[0].mxu0
    %v488 = vadd.f32 0.0, %v487
    %v489 = vpop.f32.mrb[0].mxu0
    %490 = vmatprep.mubr.bf16.mxu0 0
    %491 = vmatmul.mubr.bf16.gmra.mrb[0].mxu0 %v379
    %v492 = vpop.f32.mrb[0].mxu0
    %v493 = vadd.f32 0.0, %v492
    %v494 = vpop.f32.mrb[0].mxu0
    %v495 = vpop.f32.mrb[0].mxu0
    %v496 = vadd.f32 0.0, %v495
    %v497 = vpop.f32.mrb[0].mxu0
    %498 = vmatprep.mubr.bf16.mxu0 0
    %499 = vmatmul.mubr.bf16.gmra.mrb[0].mxu0 %v380
    %v500 = vpop.f32.mrb[0].mxu0
    %v501 = vadd.f32 0.0, %v500
    %v502 = vpop.f32.mrb[0].mxu0
    %v503 = vpop.f32.mrb[0].mxu0
    %v504 = vadd.f32 0.0, %v503
    %v505 = vpop.f32.mrb[0].mxu0
    %506 = vmatprep.mubr.bf16.mxu0 0
    %507 = vmatmul.mubr.bf16.gmra.mrb[0].mxu0 %v381
    %v508 = vpop.f32.mrb[0].mxu0
    %v509 = vadd.f32 0.0, %v508
    %v510 = vpop.f32.mrb[0].mxu0
    %v511 = vpop.f32.mrb[0].mxu0
    %v512 = vadd.f32 0.0, %v511
    %v513 = vpop.f32.mrb[0].mxu0
    %514 = vmatprep.mubr.bf16.mxu0 0
    %515 = vmatmul.mubr.bf16.gmra.mrb[0].mxu0 %v382
    %v516 = vpop.f32.mrb[0].mxu0
    %v517 = vadd.f32 0.0, %v516
    %v518 = vpop.f32.mrb[0].mxu0
    %v519 = vpop.f32.mrb[0].mxu0
    %v520 = vadd.f32 0.0, %v519
    %v521 = vpop.f32.mrb[0].mxu0
    %522 = vmatprep.mubr.bf16.mxu0 0
    %523 = vmatmul.mubr.bf16.gmra.mrb[0].mxu0 %v383
    %v524 = vpop.f32.mrb[0].mxu0
    %v525 = vadd.f32 0.0, %v524
    %v526 = vpop.f32.mrb[0].mxu0
    %v527 = vpop.f32.mrb[0].mxu0
    %v528 = vadd.f32 0.0, %v527
    %v529 = vpop.f32.mrb[0].mxu0
    %530 = vmatprep.mubr.bf16.mxu0 0
    %531 = vmatmul.mubr.bf16.gmra.mrb[0].mxu0 %v384
    %v532 = vpop.f32.mrb[0].mxu0
    %v533 = vadd.f32 0.0, %v532
    %v534 = vpop.f32.mrb[0].mxu0
    %v535 = vpop.f32.mrb[0].mxu0
    %v536 = vadd.f32 0.0, %v535
    %v537 = vpop.f32.mrb[0].mxu0
    %538 = vmatprep.mubr.bf16.mxu0 0
    %539 = vmatmul.mubr.bf16.gmra.mrb[0].mxu0 %v385
    %v540 = vpop.f32.mrb[0].mxu0
    %v541 = vadd.f32 0.0, %v540
    %v542 = vpop.f32.mrb[0].mxu0
    %v543 = vpop.f32.mrb[0].mxu0
    %v544 = vadd.f32 0.0, %v543
    %v545 = vpop.f32.mrb[0].mxu0
    %546 = vdwg.mxu0
    %v547 = vpack.c.bf16 %v488, %v485
    %v548 = vpack.c.bf16 %v496, %v493
    %v549 = vpack.c.bf16 %v504, %v501
    %v550 = vpack.c.bf16 %v512, %v509
    %v551 = vpack.c.bf16 %v520, %v517
    %v552 = vpack.c.bf16 %v528, %v525
    %v553 = vpack.c.bf16 %v536, %v533
    %v554 = vpack.c.bf16 %v544, %v541
    %v563 = vunpack.c.l.b16 %v547
    %v564 = vunpack.c.h.b16 %v547
    %v565 = vunpack.c.l.b16 %v548
    %v566 = vunpack.c.h.b16 %v548
    %v567 = vunpack.c.l.b16 %v549
    %v568 = vunpack.c.h.b16 %v549
    %v569 = vunpack.c.l.b16 %v550
    %v570 = vunpack.c.h.b16 %v550
    %v571 = vunpack.c.l.b16 %v551
    %v572 = vunpack.c.h.b16 %v551
    %v573 = vunpack.c.l.b16 %v552
    %v574 = vunpack.c.h.b16 %v552
    %v575 = vunpack.c.l.b16 %v553
    %v576 = vunpack.c.h.b16 %v553
    %v577 = vunpack.c.l.b16 %v554
    %v578 = vunpack.c.h.b16 %v554
    %v579 = vpack.c.b16 %v563, %v563
    %v580 = vpack.c.b16 %v564, %v564
    %v581 = vpack.c.b16 %v565, %v565
    %v582 = vpack.c.b16 %v566, %v566
    %v583 = vpack.c.b16 %v567, %v567
    %v584 = vpack.c.b16 %v568, %v568
    %v585 = vpack.c.b16 %v569, %v569
    %v586 = vpack.c.b16 %v570, %v570
    %v587 = vpack.c.b16 %v571, %v571
    %v588 = vpack.c.b16 %v572, %v572
    %v589 = vpack.c.b16 %v573, %v573
    %v590 = vpack.c.b16 %v574, %v574
    %v591 = vpack.c.b16 %v575, %v575
    %v592 = vpack.c.b16 %v576, %v576
    %v593 = vpack.c.b16 %v577, %v577
    %v594 = vpack.c.b16 %v578, %v578
    %611 = vst [vmem:[%s4] sm:$0xf] %v579
    %612 = vst [vmem:[%s4 + $0x4] sm:$0xf] %v580
    %613 = vst [vmem:[%s4 + $0x8] sm:$0xf] %v581
    %614 = vst [vmem:[%s4 + $0xc] sm:$0xf] %v582
    %615 = vst [vmem:[%s4 + $0x10] sm:$0xf] %v583
    %616 = vst [vmem:[%s4 + $0x14] sm:$0xf] %v584
    %617 = vst [vmem:[%s4 + $0x18] sm:$0xf] %v585
    %618 = vst [vmem:[%s4 + $0x1c] sm:$0xf] %v586
    %619 = vst [vmem:[%s4 + $0x20] sm:$0xf] %v587
    %620 = vst [vmem:[%s4 + $0x24] sm:$0xf] %v588
    %621 = vst [vmem:[%s4 + $0x28] sm:$0xf] %v589
    %622 = vst [vmem:[%s4 + $0x2c] sm:$0xf] %v590
    %623 = vst [vmem:[%s4 + $0x30] sm:$0xf] %v591
    %624 = vst [vmem:[%s4 + $0x34] sm:$0xf] %v592
    %625 = vst [vmem:[%s4 + $0x38] sm:$0xf] %v593
    %626 = vst [vmem:[%s4 + $0x3c] sm:$0xf] %v594
  $region29: #{encoder_forward.4} parent=0 // pred_fallthru
    _
  // Predicated region
  $region30: #{encoder_forward.4} parent=0 // pred_check
    _
  $region31: #{encoder_forward.4} parent=0 // pred_check_branch
    %628 = sbr.rel (0) target = $region33
  $region32: #{encoder_forward.4} parent=0 // pred_region
    _
  $region33: #{encoder_forward.4} parent=0 // pred_fallthru
    _
  // Predicated region
  $region34: #{encoder_forward.4} parent=0 // pred_check
    _
  $region35: #{encoder_forward.4} parent=0 // pred_check_branch
    %630 = sbr.rel (0) target = $region37
  $region36: #{encoder_forward.4} parent=0 // pred_region
    _
  $region37: #{encoder_forward.4} parent=0 // pred_fallthru
    _

</llo_original>
